<compile_context>
chip_gen: v7x
topology: tpu7x:2x2x1
jax: 0.10.0
libtpu: 0.0.40
codegen_flags: <defaults>
</compile_context>

<pallas_src>
import functools

import numpy as np
import jax
import jax.numpy as jnp
from jax.experimental import pallas as pl
from jax.experimental.pallas import tpu as pltpu


# ----------------------------------------------------------------------------
# Fused kernel: projections + attention + output projection for a batch tile.
# ----------------------------------------------------------------------------
def _fused_sha_kernel(q_ref, k_ref, v_ref,
                      wq_ref, bq_ref, wk_ref, bk_ref, wv_ref, bv_ref,
                      wo_ref, bo_ref,
                      o_ref, w_ref, *, s_valid, mxu_dtype):
    bt, T, E = q_ref.shape
    s_pad = k_ref.shape[1]
    D = wq_ref.shape[1]
    e_out = wo_ref.shape[1]

    def mx(x):
        # On v6e/v7x pass mxu_dtype=jnp.bfloat16 to halve MXU-operand width
        # (f32 accumulation kept via preferred_element_type below).
        return x if mxu_dtype is None else x.astype(mxu_dtype)

    def proj(x_ref, w, b, rows):
        x2 = x_ref[...].reshape(rows, E)
        y = jnp.dot(mx(x2), mx(w[...]), preferred_element_type=jnp.float32)
        return y + b[...].astype(jnp.float32)

    # Weight-norm Linear at inference = dense matmul with effective W, b.
    # Softmax scale is already folded into wq/bq by the wrapper.
    q = proj(q_ref, wq_ref, bq_ref, bt * T).reshape(bt, T, D)
    k = proj(k_ref, wk_ref, bk_ref, bt * s_pad).reshape(bt, s_pad, D)
    v = proj(v_ref, wv_ref, bv_ref, bt * s_pad).reshape(bt, s_pad, D)

    # scores = q @ k^T (batched), f32 accumulation on the MXU.
    s = jnp.einsum("bqd,bkd->bqk", mx(q), mx(k), preferred_element_type=jnp.float32)
    if s_valid < s_pad:
        # Mask the zero-padded key columns (pad keeps the weights store lane-dense).
        col = jax.lax.broadcasted_iota(jnp.int32, (bt, T, s_pad), 2)
        s = jnp.where(col < s_valid, s, jnp.float32(-1e30))

    s_max = jnp.max(s, axis=-1, keepdims=True)
    p = jnp.exp(s - s_max)
    # Exact reciprocal keeps the 1e-5 check; pl.reciprocal(..., approx=True)
    # is available if tolerance allows.
    inv = 1.0 / jnp.sum(p, axis=-1, keepdims=True)

    # PV matmul on the UNnormalized probabilities; normalize afterwards so the
    # MXU push is not serialized behind the (T, S) normalization multiply.
    av = jnp.einsum("bqk,bkd->bqd", mx(p), mx(v),
                    preferred_element_type=jnp.float32) * inv

    # Output projection.
    o = jnp.dot(mx(av.reshape(bt * T, D)), mx(wo_ref[...]),
                preferred_element_type=jnp.float32) + bo_ref[...].astype(jnp.float32)
    o_ref[...] = o.reshape(bt, T, e_out).astype(o_ref.dtype)

    # Store the softmax weights after the matmuls (overlaps MXU drain).
    w_ref[...] = (p * inv).astype(w_ref.dtype)


def _pick_batch_tile(B, bytes_per_batch, target_bytes=256 * 1024):
    """Biggest batch tile near the DMA byte target, keeping >=2 grid programs
    (v7x megacore) and dividing B evenly."""
    bt = max(1, min(B, target_bytes // max(bytes_per_batch, 1)))
    if B >= 2:
        bt = min(bt, B // 2)
    bt = max(bt, 1)
    while B % bt:
        bt -= 1
    return bt


def _fused_forward(qb, kb, vb, wq, bq, wk, bk, wv, bv, wo, bo,
                   *, s_valid, mxu_dtype=None):
    """qb: (B, T, E); kb/vb: (B, S_pad, E). Returns (attn (B,T,E_out),
    weights (B,T,S_pad))."""
    B, T, E = qb.shape
    s_pad = kb.shape[1]
    D = wq.shape[1]
    e_out = wo.shape[1]

    bt = _pick_batch_tile(B, (T + 2 * s_pad) * E * qb.dtype.itemsize)
    grid = (B // bt,)

    kern = functools.partial(_fused_sha_kernel, s_valid=s_valid, mxu_dtype=mxu_dtype)
    const2 = lambda b: (0, 0)   # weights resident in VMEM across grid steps

    # TODO(synk): for very long sequences replace the full-(T, S) score block
    # with an S-tiled online-softmax (flash) variant to bound VMEM on v7x.
    attn, weights = pl.pallas_call(
        kern,
        out_shape=(
            jax.ShapeDtypeStruct((B, T, e_out), qb.dtype),
            jax.ShapeDtypeStruct((B, T, s_pad), jnp.float32),
        ),
        grid_spec=pltpu.PrefetchScalarGridSpec(
            num_scalar_prefetch=0,
            grid=grid,
            in_specs=[
                pl.BlockSpec((bt, T, E), lambda b: (b, 0, 0)),
                pl.BlockSpec((bt, s_pad, E), lambda b: (b, 0, 0)),
                pl.BlockSpec((bt, s_pad, E), lambda b: (b, 0, 0)),
                pl.BlockSpec((E, D), const2),
                pl.BlockSpec((1, D), const2),
                pl.BlockSpec((E, D), const2),
                pl.BlockSpec((1, D), const2),
                pl.BlockSpec((E, D), const2),
                pl.BlockSpec((1, D), const2),
                pl.BlockSpec((D, e_out), const2),
                pl.BlockSpec((1, e_out), const2),
            ],
            out_specs=[
                pl.BlockSpec((bt, T, e_out), lambda b: (b, 0, 0)),
                pl.BlockSpec((bt, T, s_pad), lambda b: (b, 0, 0)),
            ],
        ),
        compiler_params=pltpu.CompilerParams(dimension_semantics=("parallel",)),
    )(qb, kb, vb,
      wq, bq.reshape(1, -1), wk, bk.reshape(1, -1),
      wv, bv.reshape(1, -1), wo, bo.reshape(1, -1))
    return attn, weights


# ----------------------------------------------------------------------------
# SingleHeadAttention forward (defaults: no future mask / padding mask / bias-row)
# ----------------------------------------------------------------------------
def single_head_attention_forward(params, query, key, value, *, head_dim,
                                  num_heads=1, head_index=0, downsample=False,
                                  project_input=True, mxu_dtype=None):
    # TODO(synk): gated=True (GatedLinear), num_heads>1, project_input=False,
    # mask_future_timesteps, key_padding_mask, use_scalar_bias and dropout>0
    # are not implemented (module defaults: off / 0.0 / 1 head).
    assert num_heads == 1 and project_input

    tgt_len, bsz, embed_dim = query.shape
    scaling = head_dim ** (-0.5)

    k, v = key, value
    if downsample:
        # Downsample module: x[::head_index + 1] -- memcpy-like strided slice,
        # left to XLA rather than a dedicated copy kernel.
        stride = head_index + 1
        k = k[::stride]
        v = v[::stride]
    src_len = k.shape[0]

    # One boundary transpose each to batch-major; everything after is fused.
    qb = jnp.transpose(query, (1, 0, 2))   # (B, T, E)
    kb = jnp.transpose(k, (1, 0, 2))       # (B, S, E)
    vb = jnp.transpose(v, (1, 0, 2))

    # Round S up to a multiple of 128 so the attention-weight stores are
    # lane-dense; padded columns are masked inside the kernel.
    s_pad = ((src_len + 127) // 128) * 128
    if s_pad != src_len:
        kb = jnp.pad(kb, ((0, 0), (0, s_pad - src_len), (0, 0)))
        vb = jnp.pad(vb, ((0, 0), (0, s_pad - src_len), (0, 0)))

    # Fold the softmax scaling into the q projection parameters.
    wq = params["wq"] * scaling
    bq = params["bq"] * scaling

    attn_b, w_pad = _fused_forward(
        qb, kb, vb, wq, bq, params["wk"], params["bk"],
        params["wv"], params["bv"], params["wo"], params["bo"],
        s_valid=src_len, mxu_dtype=mxu_dtype)

    attn = jnp.transpose(attn_b, (1, 0, 2))            # (tgt_len, bsz, out)
    attn_weights = w_pad[:, :, :src_len]                # (bsz, tgt_len, src_len)
    return attn, attn_weights


# ----------------------------------------------------------------------------
# Pure-JAX reference (same math, no Pallas) for correctness checking.
# ----------------------------------------------------------------------------
def _ref_forward(params, query, key, value, *, head_dim, num_heads=1,
                 head_index=0, downsample=False, project_input=True):
    tgt_len, bsz, embed_dim = query.shape
    scaling = head_dim ** (-0.5)
    q, k, v = query, key, value
    if downsample:
        stride = head_index + 1
        k = k[::stride]
        v = v[::stride]
    if project_input:
        q = q @ params["wq"] + params["bq"]
        k = k @ params["wk"] + params["bk"]
        v = v @ params["wv"] + params["bv"]
    src_len = k.shape[0]
    q = q * scaling
    if not downsample:
        size = bsz * num_heads
        q = q.reshape(tgt_len, size, head_dim)
        k = k.reshape(src_len, size, head_dim)
        v = v.reshape(src_len, size, head_dim)
    q = jnp.transpose(q, (1, 0, 2))
    k = jnp.transpose(k, (1, 0, 2))
    v = jnp.transpose(v, (1, 0, 2))
    w = jnp.einsum("btd,bsd->bts", q, k)
    w = jax.nn.softmax(w, axis=-1)
    attn = jnp.einsum("bts,bsd->btd", w, v)
    attn = jnp.transpose(attn, (1, 0, 2)).reshape(tgt_len, bsz, -1)
    attn = attn @ params["wo"] + params["bo"]
    return attn, w


if __name__ == "__main__":
    rng = jax.random.PRNGKey(0)
    keys = jax.random.split(rng, 11)

    # Small shapes: seq=16, batch=2, embed_dim=32, head_dim=32, num_heads=1.
    T, B, E, D = 16, 2, 32, 32
    query = jax.random.normal(keys[0], (T, B, E), dtype=jnp.float32)
    key_t = jax.random.normal(keys[1], (T, B, E), dtype=jnp.float32)
    value = jax.random.normal(keys[2], (T, B, E), dtype=jnp.float32)

    def winit(k, shape):
        return jax.random.normal(k, shape, dtype=jnp.float32) * (1.0 / np.sqrt(shape[0]))

    # Effective (post weight-norm) dense weights; stored as (in, out).
    params = {
        "wq": winit(keys[3], (E, D)), "bq": 0.1 * jax.random.normal(keys[4], (D,), jnp.float32),
        "wk": winit(keys[5], (E, D)), "bk": 0.1 * jax.random.normal(keys[6], (D,), jnp.float32),
        "wv": winit(keys[7], (E, D)), "bv": 0.1 * jax.random.normal(keys[8], (D,), jnp.float32),
        "wo": winit(keys[9], (D, E)), "bo": 0.1 * jax.random.normal(keys[10], (E,), jnp.float32),
    }

    # --- standard path: project_input=True, gated=False, downsample=False ---
    attn, w = single_head_attention_forward(params, query, key_t, value,
                                            head_dim=D, num_heads=1)
    attn = jax.block_until_ready(attn)
    w = jax.block_until_ready(w)
    ref_attn, ref_w = _ref_forward(params, query, key_t, value, head_dim=D, num_heads=1)
    np.testing.assert_allclose(np.asarray(attn), np.asarray(ref_attn), rtol=1e-5, atol=1e-5)
    np.testing.assert_allclose(np.asarray(w), np.asarray(ref_w), rtol=1e-5, atol=1e-5)

    # --- downsample path: Downsample(head_index=1) on key/value (k/v = x[::2]) ---
    attn_ds, w_ds = single_head_attention_forward(params, query, key_t, value,
                                                  head_dim=D, num_heads=1,
                                                  head_index=1, downsample=True)
    attn_ds = jax.block_until_ready(attn_ds)
    w_ds = jax.block_until_ready(w_ds)
    ref_attn_ds, ref_w_ds = _ref_forward(params, query, key_t, value, head_dim=D,
                                         num_heads=1, head_index=1, downsample=True)
    np.testing.assert_allclose(np.asarray(attn_ds), np.asarray(ref_attn_ds), rtol=1e-5, atol=1e-5)
    np.testing.assert_allclose(np.asarray(w_ds), np.asarray(ref_w_ds), rtol=1e-5, atol=1e-5)

    print("KERNEL_OK")
</pallas_src>

<mosaic_0001>
module attributes {stable_mosaic.version = 11 : i64} {
  func.func @_fused_sha_kernel(%arg0: i32, %arg1: memref<1x16x32xf32, #tpu.memory_space<vmem>>, %arg2: memref<1x128x32xf32, #tpu.memory_space<vmem>>, %arg3: memref<1x128x32xf32, #tpu.memory_space<vmem>>, %arg4: memref<32x32xf32, #tpu.memory_space<vmem>>, %arg5: memref<1x32xf32, #tpu.memory_space<vmem>>, %arg6: memref<32x32xf32, #tpu.memory_space<vmem>>, %arg7: memref<1x32xf32, #tpu.memory_space<vmem>>, %arg8: memref<32x32xf32, #tpu.memory_space<vmem>>, %arg9: memref<1x32xf32, #tpu.memory_space<vmem>>, %arg10: memref<32x32xf32, #tpu.memory_space<vmem>>, %arg11: memref<1x32xf32, #tpu.memory_space<vmem>>, %arg12: memref<1x16x32xf32, #tpu.memory_space<vmem>>, %arg13: memref<1x16x128xf32, #tpu.memory_space<vmem>>) attributes {dimension_semantics = [#tpu.dimension_semantics<parallel>], iteration_bounds = array<i64: 2>, scalar_prefetch = 0 : i64, scratch_operands = 0 : i64, tpu.core_type = #tpu.core_type<tc>, window_params = [{transform_indices = @transform_0, window_bounds = array<i64: 1, 16, 32>}, {transform_indices = @transform_1, window_bounds = array<i64: 1, 128, 32>}, {transform_indices = @transform_2, window_bounds = array<i64: 1, 128, 32>}, {pipeline_mode = #tpu.pipeline_mode<synchronous>, transform_indices = @transform_3, window_bounds = array<i64: 32, 32>}, {pipeline_mode = #tpu.pipeline_mode<synchronous>, transform_indices = @transform_4, window_bounds = array<i64: 1, 32>}, {pipeline_mode = #tpu.pipeline_mode<synchronous>, transform_indices = @transform_5, window_bounds = array<i64: 32, 32>}, {pipeline_mode = #tpu.pipeline_mode<synchronous>, transform_indices = @transform_6, window_bounds = array<i64: 1, 32>}, {pipeline_mode = #tpu.pipeline_mode<synchronous>, transform_indices = @transform_7, window_bounds = array<i64: 32, 32>}, {pipeline_mode = #tpu.pipeline_mode<synchronous>, transform_indices = @transform_8, window_bounds = array<i64: 1, 32>}, {pipeline_mode = #tpu.pipeline_mode<synchronous>, transform_indices = @transform_9, window_bounds = array<i64: 32, 32>}, {pipeline_mode = #tpu.pipeline_mode<synchronous>, transform_indices = @transform_10, window_bounds = array<i64: 1, 32>}, {transform_indices = @transform_11, window_bounds = array<i64: 1, 16, 32>}, {transform_indices = @transform_12, window_bounds = array<i64: 1, 16, 128>}]} {
    %c0 = arith.constant 0 : index
    %c0_0 = arith.constant 0 : index
    %c0_1 = arith.constant 0 : index
    %0 = vector.load %arg1[%c0, %c0_0, %c0_1] : memref<1x16x32xf32, #tpu.memory_space<vmem>>, vector<1x16x32xf32>
    %1 = vector.shape_cast %0 : vector<1x16x32xf32> to vector<16x32xf32>
    %c0_2 = arith.constant 0 : index
    %c0_3 = arith.constant 0 : index
    %2 = vector.load %arg4[%c0_2, %c0_3] : memref<32x32xf32, #tpu.memory_space<vmem>>, vector<32x32xf32>
    %cst = arith.constant dense<0.000000e+00> : vector<16x32xf32>
    %3 = tpu.matmul %1, %2, %cst {dimension_numbers = #tpu.dot_dimension_numbers<[1], [0], [0], [1], [0, 0, 1, 1], [], []>} : vector<16x32xf32>, vector<32x32xf32>, vector<16x32xf32> -> vector<16x32xf32>
    %c0_4 = arith.constant 0 : index
    %c0_5 = arith.constant 0 : index
    %4 = vector.load %arg5[%c0_4, %c0_5] : memref<1x32xf32, #tpu.memory_space<vmem>>, vector<1x32xf32>
    %5 = vector.broadcast %4 : vector<1x32xf32> to vector<16x32xf32>
    %6 = arith.addf %3, %5 : vector<16x32xf32>
    %7 = vector.shape_cast %6 : vector<16x32xf32> to vector<1x16x32xf32>
    %c0_6 = arith.constant 0 : index
    %c0_7 = arith.constant 0 : index
    %c0_8 = arith.constant 0 : index
    %8 = vector.load %arg2[%c0_6, %c0_7, %c0_8] : memref<1x128x32xf32, #tpu.memory_space<vmem>>, vector<1x128x32xf32>
    %9 = vector.shape_cast %8 : vector<1x128x32xf32> to vector<128x32xf32>
    %c0_9 = arith.constant 0 : index
    %c0_10 = arith.constant 0 : index
    %10 = vector.load %arg6[%c0_9, %c0_10] : memref<32x32xf32, #tpu.memory_space<vmem>>, vector<32x32xf32>
    %cst_11 = arith.constant dense<0.000000e+00> : vector<128x32xf32>
    %11 = tpu.matmul %9, %10, %cst_11 {dimension_numbers = #tpu.dot_dimension_numbers<[1], [0], [0], [1], [0, 0, 1, 1], [], []>} : vector<128x32xf32>, vector<32x32xf32>, vector<128x32xf32> -> vector<128x32xf32>
    %c0_12 = arith.constant 0 : index
    %c0_13 = arith.constant 0 : index
    %12 = vector.load %arg7[%c0_12, %c0_13] : memref<1x32xf32, #tpu.memory_space<vmem>>, vector<1x32xf32>
    %13 = vector.broadcast %12 : vector<1x32xf32> to vector<128x32xf32>
    %14 = arith.addf %11, %13 : vector<128x32xf32>
    %15 = vector.shape_cast %14 : vector<128x32xf32> to vector<1x128x32xf32>
    %c0_14 = arith.constant 0 : index
    %c0_15 = arith.constant 0 : index
    %c0_16 = arith.constant 0 : index
    %16 = vector.load %arg3[%c0_14, %c0_15, %c0_16] : memref<1x128x32xf32, #tpu.memory_space<vmem>>, vector<1x128x32xf32>
    %17 = vector.shape_cast %16 : vector<1x128x32xf32> to vector<128x32xf32>
    %c0_17 = arith.constant 0 : index
    %c0_18 = arith.constant 0 : index
    %18 = vector.load %arg8[%c0_17, %c0_18] : memref<32x32xf32, #tpu.memory_space<vmem>>, vector<32x32xf32>
    %cst_19 = arith.constant dense<0.000000e+00> : vector<128x32xf32>
    %19 = tpu.matmul %17, %18, %cst_19 {dimension_numbers = #tpu.dot_dimension_numbers<[1], [0], [0], [1], [0, 0, 1, 1], [], []>} : vector<128x32xf32>, vector<32x32xf32>, vector<128x32xf32> -> vector<128x32xf32>
    %c0_20 = arith.constant 0 : index
    %c0_21 = arith.constant 0 : index
    %20 = vector.load %arg9[%c0_20, %c0_21] : memref<1x32xf32, #tpu.memory_space<vmem>>, vector<1x32xf32>
    %21 = vector.broadcast %20 : vector<1x32xf32> to vector<128x32xf32>
    %22 = arith.addf %19, %21 : vector<128x32xf32>
    %23 = vector.shape_cast %22 : vector<128x32xf32> to vector<1x128x32xf32>
    "tpu.trace_start"() <{level = 10 : i32, message = "bqd,bkd->bqk"}> : () -> ()
    %cst_22 = arith.constant dense<0.000000e+00> : vector<1x16x128xf32>
    %24 = tpu.matmul %7, %15, %cst_22 {dimension_numbers = #tpu.dot_dimension_numbers<[2], [2], [1], [1], [0, 0, 0, 1, 1, 1], [0], [0]>} : vector<1x16x32xf32>, vector<1x128x32xf32>, vector<1x16x128xf32> -> vector<1x16x128xf32>
    "tpu.trace_stop"() : () -> ()
    %25 = tpu.iota {dimensions = array<i32: 2>} : vector<1x16x128xi32>
    %c16_i32 = arith.constant 16 : i32
    %26 = vector.broadcast %c16_i32 : i32 to vector<1x16x128xi32>
    %27 = arith.cmpi slt, %25, %26 : vector<1x16x128xi32>
    %cst_23 = arith.constant -1.000000e+30 : f32
    %28 = vector.broadcast %cst_23 : f32 to vector<1x16x128xf32>
    %29 = arith.select %27, %24, %28 : vector<1x16x128xi1>, vector<1x16x128xf32>
    %cst_24 = arith.constant dense<0xFF800000> : vector<1x16xf32>
    %30 = vector.multi_reduction <maximumf>, %29, %cst_24 [2] : vector<1x16x128xf32> to vector<1x16xf32>
    %31 = vector.shape_cast %30 : vector<1x16xf32> to vector<1x16x1xf32>
    %32 = vector.broadcast %31 : vector<1x16x1xf32> to vector<1x16x128xf32>
    %33 = arith.subf %29, %32 : vector<1x16x128xf32>
    %34 = math.exp %33 : vector<1x16x128xf32>
    %cst_25 = arith.constant dense<0.000000e+00> : vector<1x16xf32>
    %35 = vector.multi_reduction <add>, %34, %cst_25 [2] : vector<1x16x128xf32> to vector<1x16xf32>
    %36 = vector.shape_cast %35 : vector<1x16xf32> to vector<1x16x1xf32>
    %cst_26 = arith.constant 1.000000e+00 : f32
    %37 = vector.broadcast %cst_26 : f32 to vector<1x16x1xf32>
    %38 = arith.divf %37, %36 : vector<1x16x1xf32>
    "tpu.trace_start"() <{level = 10 : i32, message = "bqk,bkd->bqd"}> : () -> ()
    %cst_27 = arith.constant dense<0.000000e+00> : vector<1x16x32xf32>
    %39 = tpu.matmul %34, %23, %cst_27 {dimension_numbers = #tpu.dot_dimension_numbers<[2], [1], [1], [2], [0, 0, 0, 1, 1, 2], [0], [0]>} : vector<1x16x128xf32>, vector<1x128x32xf32>, vector<1x16x32xf32> -> vector<1x16x32xf32>
    "tpu.trace_stop"() : () -> ()
    %40 = vector.broadcast %38 : vector<1x16x1xf32> to vector<1x16x32xf32>
    %41 = arith.mulf %39, %40 : vector<1x16x32xf32>
    %42 = vector.shape_cast %41 : vector<1x16x32xf32> to vector<16x32xf32>
    %c0_28 = arith.constant 0 : index
    %c0_29 = arith.constant 0 : index
    %43 = vector.load %arg10[%c0_28, %c0_29] : memref<32x32xf32, #tpu.memory_space<vmem>>, vector<32x32xf32>
    %cst_30 = arith.constant dense<0.000000e+00> : vector<16x32xf32>
    %44 = tpu.matmul %42, %43, %cst_30 {dimension_numbers = #tpu.dot_dimension_numbers<[1], [0], [0], [1], [0, 0, 1, 1], [], []>} : vector<16x32xf32>, vector<32x32xf32>, vector<16x32xf32> -> vector<16x32xf32>
    %c0_31 = arith.constant 0 : index
    %c0_32 = arith.constant 0 : index
    %45 = vector.load %arg11[%c0_31, %c0_32] : memref<1x32xf32, #tpu.memory_space<vmem>>, vector<1x32xf32>
    %46 = vector.broadcast %45 : vector<1x32xf32> to vector<16x32xf32>
    %47 = arith.addf %44, %46 : vector<16x32xf32>
    %48 = vector.shape_cast %47 : vector<16x32xf32> to vector<1x16x32xf32>
    %c0_33 = arith.constant 0 : index
    %c0_34 = arith.constant 0 : index
    %c0_35 = arith.constant 0 : index
    %49 = vector.load %arg12[%c0_33, %c0_34, %c0_35] : memref<1x16x32xf32, #tpu.memory_space<vmem>>, vector<1x16x32xf32>
    tpu.vector_store %arg12[%c0_33, %c0_34, %c0_35], %48 {strides = array<i32>} : memref<1x16x32xf32, #tpu.memory_space<vmem>>, vector<1x16x32xf32>,
    %50 = vector.broadcast %38 : vector<1x16x1xf32> to vector<1x16x128xf32>
    %51 = arith.mulf %34, %50 : vector<1x16x128xf32>
    %c0_36 = arith.constant 0 : index
    %c0_37 = arith.constant 0 : index
    %c0_38 = arith.constant 0 : index
    %52 = vector.load %arg13[%c0_36, %c0_37, %c0_38] : memref<1x16x128xf32, #tpu.memory_space<vmem>>, vector<1x16x128xf32>
    tpu.vector_store %arg13[%c0_36, %c0_37, %c0_38], %51 {strides = array<i32>} : memref<1x16x128xf32, #tpu.memory_space<vmem>>, vector<1x16x128xf32>,
    return
  }
  func.func @transform_0(%arg0: i32) -> (i32, i32, i32) {
    %c0_i32 = arith.constant 0 : i32
    %c0_i32_0 = arith.constant 0 : i32
    %c0_i32_1 = arith.constant 0 : i32
    return %arg0, %c0_i32, %c0_i32_0 : i32, i32, i32
  }
  func.func @transform_1(%arg0: i32) -> (i32, i32, i32) {
    %c0_i32 = arith.constant 0 : i32
    %c0_i32_0 = arith.constant 0 : i32
    %c0_i32_1 = arith.constant 0 : i32
    return %arg0, %c0_i32, %c0_i32_0 : i32, i32, i32
  }
  func.func @transform_2(%arg0: i32) -> (i32, i32, i32) {
    %c0_i32 = arith.constant 0 : i32
    %c0_i32_0 = arith.constant 0 : i32
    %c0_i32_1 = arith.constant 0 : i32
    return %arg0, %c0_i32, %c0_i32_0 : i32, i32, i32
  }
  func.func @transform_3(%arg0: i32) -> (i32, i32) {
    %c0_i32 = arith.constant 0 : i32
    %c0_i32_0 = arith.constant 0 : i32
    %c0_i32_1 = arith.constant 0 : i32
    return %c0_i32, %c0_i32_0 : i32, i32
  }
  func.func @transform_4(%arg0: i32) -> (i32, i32) {
    %c0_i32 = arith.constant 0 : i32
    %c0_i32_0 = arith.constant 0 : i32
    %c0_i32_1 = arith.constant 0 : i32
    return %c0_i32, %c0_i32_0 : i32, i32
  }
  func.func @transform_5(%arg0: i32) -> (i32, i32) {
    %c0_i32 = arith.constant 0 : i32
    %c0_i32_0 = arith.constant 0 : i32
    %c0_i32_1 = arith.constant 0 : i32
    return %c0_i32, %c0_i32_0 : i32, i32
  }
  func.func @transform_6(%arg0: i32) -> (i32, i32) {
    %c0_i32 = arith.constant 0 : i32
    %c0_i32_0 = arith.constant 0 : i32
    %c0_i32_1 = arith.constant 0 : i32
    return %c0_i32, %c0_i32_0 : i32, i32
  }
  func.func @transform_7(%arg0: i32) -> (i32, i32) {
    %c0_i32 = arith.constant 0 : i32
    %c0_i32_0 = arith.constant 0 : i32
    %c0_i32_1 = arith.constant 0 : i32
    return %c0_i32, %c0_i32_0 : i32, i32
  }
  func.func @transform_8(%arg0: i32) -> (i32, i32) {
    %c0_i32 = arith.constant 0 : i32
    %c0_i32_0 = arith.constant 0 : i32
    %c0_i32_1 = arith.constant 0 : i32
    return %c0_i32, %c0_i32_0 : i32, i32
  }
  func.func @transform_9(%arg0: i32) -> (i32, i32) {
    %c0_i32 = arith.constant 0 : i32
    %c0_i32_0 = arith.constant 0 : i32
    %c0_i32_1 = arith.constant 0 : i32
    return %c0_i32, %c0_i32_0 : i32, i32
  }
  func.func @transform_10(%arg0: i32) -> (i32, i32) {
    %c0_i32 = arith.constant 0 : i32
    %c0_i32_0 = arith.constant 0 : i32
    %c0_i32_1 = arith.constant 0 : i32
    return %c0_i32, %c0_i32_0 : i32, i32
  }
  func.func @transform_11(%arg0: i32) -> (i32, i32, i32) {
    %c0_i32 = arith.constant 0 : i32
    %c0_i32_0 = arith.constant 0 : i32
    %c0_i32_1 = arith.constant 0 : i32
    return %arg0, %c0_i32, %c0_i32_0 : i32, i32, i32
  }
  func.func @transform_12(%arg0: i32) -> (i32, i32, i32) {
    %c0_i32 = arith.constant 0 : i32
    %c0_i32_0 = arith.constant 0 : i32
    %c0_i32_1 = arith.constant 0 : i32
    return %arg0, %c0_i32, %c0_i32_0 : i32, i32, i32
  }
}

</mosaic_0001>

<llo_original>
// kernel: tpu_custom_call.1
$region0: #{tpu_custom_call.1}
  #allocation0 [shape = 'u32[]', space=smem, size = 0x4, offset = 0x4, fixed_abs, tag = 'smem constant byte address 0x4 - core index']
  #allocation1 [shape = 'u32[144,128]{1,0:T(1,128)}', space=vmem, size = 0x12000, scoped, tag = 'internal scratch']
  %s0 = inlined_call_operand.vmem [shape: f32[2,16,32], index: 0, kind: input, shape index: {}]
  %s1 = inlined_call_operand.vmem [shape: f32[2,128,32], index: 1, kind: input, shape index: {}]
  %s2 = inlined_call_operand.vmem [shape: f32[2,128,32], index: 2, kind: input, shape index: {}]
  %s3 = inlined_call_operand.vmem [shape: f32[32,32], index: 3, kind: input, shape index: {}]
  %s4 = inlined_call_operand.vmem [shape: f32[1,32], index: 4, kind: input, shape index: {}]
  %s5 = inlined_call_operand.vmem [shape: f32[32,32], index: 5, kind: input, shape index: {}]
  %s6 = inlined_call_operand.vmem [shape: f32[1,32], index: 6, kind: input, shape index: {}]
  %s7 = inlined_call_operand.vmem [shape: f32[32,32], index: 7, kind: input, shape index: {}]
  %s8 = inlined_call_operand.vmem [shape: f32[1,32], index: 8, kind: input, shape index: {}]
  %s9 = inlined_call_operand.vmem [shape: f32[32,32], index: 9, kind: input, shape index: {}]
  %s10 = inlined_call_operand.vmem [shape: f32[1,32], index: 10, kind: input, shape index: {}]
  %s11 = inlined_call_operand.hbm [shape: f32[2,16,32], index: 11, kind: output, shape index: {0}]
  %s12 = inlined_call_operand.hbm [shape: f32[2,16,128], index: 12, kind: output, shape index: {1}]
  %13 = xla_tuple %s11, %s12
  %s14 = sld [smem:[#allocation0]]
  $region85: #{tpu_custom_call.1} parent=0
    _
  %s16 = ssub.s32 1, %s14
  %s17 = scalar_select 0, %s16, %s14
  $region1: #{tpu_custom_call.1} parent=0
    #allocation2 [shape = 'u8[16384]{0}', space=vmem, size = 0x4000, scoped, tag = 'output window, operand 0']
    #allocation3 [shape = 's32[2]{0}', space=sflag, size = 0x8, scoped, tag = 'scoped memory for tpu_custom_call.1']
    #allocation4 [shape = 'u8[16384]{0}', space=vmem, size = 0x4000, scoped, tag = 'output window, operand 1']
    #allocation5 [shape = 's32[2]{0}', space=sflag, size = 0x8, scoped, tag = 'scoped memory for tpu_custom_call.1']
    %18 = vsyncpa [#allocation3], 0
    %s19 = scalar_lea.sflag [#allocation3], 1
    %20 = vsyncpa %s19, 0
    %21 = vsyncpa [#allocation5], 0
    %s22 = scalar_lea.sflag [#allocation5], 1
    %23 = vsyncpa %s22, 0
    loop: start=0, step=1, limit=4
    $region2: #{tpu_custom_call.1} parent=1 // loop_pre_header
      _
    $region3: #{tpu_custom_call.1} parent=1 // loop_header
      %s25 = sphi 0, %s29
      %p26 = scmp.ge.s32.totalorder %s25, 4
      %s35 = sphi 0, %s37
      %s38 = sphi 0, %s35
      %s39 = sphi 0, %s38
      %s55 = sphi 0, %s39
      %s61 = sphi 0, %s63
      %s64 = sphi 0, %s61
      %s65 = sphi 0, %s64
      %s81 = sphi 0, %s65
      %s87 = sphi 0, %s89
      %s90 = sphi 0, %s87
      %s91 = sphi 0, %s90
      %s107 = sphi 0, %s91
      %s111 = sphi 0, %s111
      %s113 = sphi 0, %s111
      %s114 = sphi 0, %s113
      %s128 = sphi 0, %s114
      %s132 = sphi 0, %s132
      %s134 = sphi 0, %s132
      %s135 = sphi 0, %s134
      %s149 = sphi 0, %s135
      %s153 = sphi 0, %s153
      %s155 = sphi 0, %s153
      %s156 = sphi 0, %s155
      %s170 = sphi 0, %s156
      %s174 = sphi 0, %s174
      %s176 = sphi 0, %s174
      %s177 = sphi 0, %s176
      %s191 = sphi 0, %s177
      %s195 = sphi 0, %s195
      %s197 = sphi 0, %s195
      %s198 = sphi 0, %s197
      %s212 = sphi 0, %s198
      %s216 = sphi 0, %s216
      %s218 = sphi 0, %s216
      %s219 = sphi 0, %s218
      %s233 = sphi 0, %s219
      %s237 = sphi 0, %s237
      %s239 = sphi 0, %s237
      %s240 = sphi 0, %s239
      %s254 = sphi 0, %s240
      %s258 = sphi 0, %s258
      %s260 = sphi 0, %s258
      %s261 = sphi 0, %s260
      %s275 = sphi 0, %s261
      %s281 = sphi 0, %s283
      %s284 = sphi 0, %s281
      %s285 = sphi 0, %s284
      %s301 = sphi 0, %s285
      %s307 = sphi 0, %s309
      %s310 = sphi 0, %s307
      %s311 = sphi 0, %s310
      %s327 = sphi 0, %s311
    $region4: #{tpu_custom_call.1} parent=1 // loop_header_branch
      %28 = sbr.rel (%p26) target = $region8
    $region5: #{tpu_custom_call.1} parent=1 // loop_body
      %s30 = ssub.s32 %s25, 1
      %s31 = ssub.s32 %s25, 2
      %s32 = sadd.s32 %s25, 1
      %s33 = ssub.s32 %s25, %s32
      %p34 = scmp.eq.s32.totalorder %s33, 0
      %s36 = sadd.s32 %s35, 1
      %s37 = scalar_select %p34, %s35, %s36
      %p40 = pneg %p34
      %p41 = scmp.eq.s32.totalorder %s25, 1
      %p42 = por %p40, %p41
      %p43 = scmp.ne.s32.totalorder %s35, %s38
      %p44 = scmp.eq.s32.totalorder %s25, 0
      %p45 = por %p43, %p44
      %p46 = scmp.ne.s32.totalorder %s35, %s38
      %p47 = scmp.eq.s32.totalorder %s30, 1
      %p48 = por %p46, %p47
      %p49 = scmp.ne.s32.totalorder %s38, %s39
      %p50 = scmp.eq.s32.totalorder %s30, 0
      %p51 = por %p49, %p50
      %p52 = scmp.ne.s32.totalorder %s38, %s39
      %p53 = scmp.eq.s32.totalorder %s31, 1
      %p54 = por %p52, %p53
      %p56 = scmp.ne.s32.totalorder %s39, %s55
      %p57 = scmp.eq.s32.totalorder %s31, 0
      %p58 = por %p56, %p57
      %s59 = ssub.s32 %s25, %s32
      %p60 = scmp.eq.s32.totalorder %s59, 0
      %s62 = sadd.s32 %s61, 1
      %s63 = scalar_select %p60, %s61, %s62
      %p66 = pneg %p60
      %p67 = scmp.eq.s32.totalorder %s25, 1
      %p68 = por %p66, %p67
      %p69 = scmp.ne.s32.totalorder %s61, %s64
      %p70 = scmp.eq.s32.totalorder %s25, 0
      %p71 = por %p69, %p70
      %p72 = scmp.ne.s32.totalorder %s61, %s64
      %p73 = scmp.eq.s32.totalorder %s30, 1
      %p74 = por %p72, %p73
      %p75 = scmp.ne.s32.totalorder %s64, %s65
      %p76 = scmp.eq.s32.totalorder %s30, 0
      %p77 = por %p75, %p76
      %p78 = scmp.ne.s32.totalorder %s64, %s65
      %p79 = scmp.eq.s32.totalorder %s31, 1
      %p80 = por %p78, %p79
      %p82 = scmp.ne.s32.totalorder %s65, %s81
      %p83 = scmp.eq.s32.totalorder %s31, 0
      %p84 = por %p82, %p83
      %s85 = ssub.s32 %s25, %s32
      %p86 = scmp.eq.s32.totalorder %s85, 0
      %s88 = sadd.s32 %s87, 1
      %s89 = scalar_select %p86, %s87, %s88
      %p92 = pneg %p86
      %p93 = scmp.eq.s32.totalorder %s25, 1
      %p94 = por %p92, %p93
      %p95 = scmp.ne.s32.totalorder %s87, %s90
      %p96 = scmp.eq.s32.totalorder %s25, 0
      %p97 = por %p95, %p96
      %p98 = scmp.ne.s32.totalorder %s87, %s90
      %p99 = scmp.eq.s32.totalorder %s30, 1
      %p100 = por %p98, %p99
      %p101 = scmp.ne.s32.totalorder %s90, %s91
      %p102 = scmp.eq.s32.totalorder %s30, 0
      %p103 = por %p101, %p102
      %p104 = scmp.ne.s32.totalorder %s90, %s91
      %p105 = scmp.eq.s32.totalorder %s31, 1
      %p106 = por %p104, %p105
      %p108 = scmp.ne.s32.totalorder %s91, %s107
      %p109 = scmp.eq.s32.totalorder %s31, 0
      %p110 = por %p108, %p109
      %s112 = sadd.s32 %s111, 1
      %p115 = scmp.eq.s32.totalorder %s25, 1
      %p116 = scmp.ne.s32.totalorder %s111, %s113
      %p117 = scmp.eq.s32.totalorder %s25, 0
      %p118 = por %p116, %p117
      %p119 = scmp.ne.s32.totalorder %s111, %s113
      %p120 = scmp.eq.s32.totalorder %s30, 1
      %p121 = por %p119, %p120
      %p122 = scmp.ne.s32.totalorder %s113, %s114
      %p123 = scmp.eq.s32.totalorder %s30, 0
      %p124 = por %p122, %p123
      %p125 = scmp.ne.s32.totalorder %s113, %s114
      %p126 = scmp.eq.s32.totalorder %s31, 1
      %p127 = por %p125, %p126
      %p129 = scmp.ne.s32.totalorder %s114, %s128
      %p130 = scmp.eq.s32.totalorder %s31, 0
      %p131 = por %p129, %p130
      %s133 = sadd.s32 %s132, 1
      %p136 = scmp.eq.s32.totalorder %s25, 1
      %p137 = scmp.ne.s32.totalorder %s132, %s134
      %p138 = scmp.eq.s32.totalorder %s25, 0
      %p139 = por %p137, %p138
      %p140 = scmp.ne.s32.totalorder %s132, %s134
      %p141 = scmp.eq.s32.totalorder %s30, 1
      %p142 = por %p140, %p141
      %p143 = scmp.ne.s32.totalorder %s134, %s135
      %p144 = scmp.eq.s32.totalorder %s30, 0
      %p145 = por %p143, %p144
      %p146 = scmp.ne.s32.totalorder %s134, %s135
      %p147 = scmp.eq.s32.totalorder %s31, 1
      %p148 = por %p146, %p147
      %p150 = scmp.ne.s32.totalorder %s135, %s149
      %p151 = scmp.eq.s32.totalorder %s31, 0
      %p152 = por %p150, %p151
      %s154 = sadd.s32 %s153, 1
      %p157 = scmp.eq.s32.totalorder %s25, 1
      %p158 = scmp.ne.s32.totalorder %s153, %s155
      %p159 = scmp.eq.s32.totalorder %s25, 0
      %p160 = por %p158, %p159
      %p161 = scmp.ne.s32.totalorder %s153, %s155
      %p162 = scmp.eq.s32.totalorder %s30, 1
      %p163 = por %p161, %p162
      %p164 = scmp.ne.s32.totalorder %s155, %s156
      %p165 = scmp.eq.s32.totalorder %s30, 0
      %p166 = por %p164, %p165
      %p167 = scmp.ne.s32.totalorder %s155, %s156
      %p168 = scmp.eq.s32.totalorder %s31, 1
      %p169 = por %p167, %p168
      %p171 = scmp.ne.s32.totalorder %s156, %s170
      %p172 = scmp.eq.s32.totalorder %s31, 0
      %p173 = por %p171, %p172
      %s175 = sadd.s32 %s174, 1
      %p178 = scmp.eq.s32.totalorder %s25, 1
      %p179 = scmp.ne.s32.totalorder %s174, %s176
      %p180 = scmp.eq.s32.totalorder %s25, 0
      %p181 = por %p179, %p180
      %p182 = scmp.ne.s32.totalorder %s174, %s176
      %p183 = scmp.eq.s32.totalorder %s30, 1
      %p184 = por %p182, %p183
      %p185 = scmp.ne.s32.totalorder %s176, %s177
      %p186 = scmp.eq.s32.totalorder %s30, 0
      %p187 = por %p185, %p186
      %p188 = scmp.ne.s32.totalorder %s176, %s177
      %p189 = scmp.eq.s32.totalorder %s31, 1
      %p190 = por %p188, %p189
      %p192 = scmp.ne.s32.totalorder %s177, %s191
      %p193 = scmp.eq.s32.totalorder %s31, 0
      %p194 = por %p192, %p193
      %s196 = sadd.s32 %s195, 1
      %p199 = scmp.eq.s32.totalorder %s25, 1
      %p200 = scmp.ne.s32.totalorder %s195, %s197
      %p201 = scmp.eq.s32.totalorder %s25, 0
      %p202 = por %p200, %p201
      %p203 = scmp.ne.s32.totalorder %s195, %s197
      %p204 = scmp.eq.s32.totalorder %s30, 1
      %p205 = por %p203, %p204
      %p206 = scmp.ne.s32.totalorder %s197, %s198
      %p207 = scmp.eq.s32.totalorder %s30, 0
      %p208 = por %p206, %p207
      %p209 = scmp.ne.s32.totalorder %s197, %s198
      %p210 = scmp.eq.s32.totalorder %s31, 1
      %p211 = por %p209, %p210
      %p213 = scmp.ne.s32.totalorder %s198, %s212
      %p214 = scmp.eq.s32.totalorder %s31, 0
      %p215 = por %p213, %p214
      %s217 = sadd.s32 %s216, 1
      %p220 = scmp.eq.s32.totalorder %s25, 1
      %p221 = scmp.ne.s32.totalorder %s216, %s218
      %p222 = scmp.eq.s32.totalorder %s25, 0
      %p223 = por %p221, %p222
      %p224 = scmp.ne.s32.totalorder %s216, %s218
      %p225 = scmp.eq.s32.totalorder %s30, 1
      %p226 = por %p224, %p225
      %p227 = scmp.ne.s32.totalorder %s218, %s219
      %p228 = scmp.eq.s32.totalorder %s30, 0
      %p229 = por %p227, %p228
      %p230 = scmp.ne.s32.totalorder %s218, %s219
      %p231 = scmp.eq.s32.totalorder %s31, 1
      %p232 = por %p230, %p231
      %p234 = scmp.ne.s32.totalorder %s219, %s233
      %p235 = scmp.eq.s32.totalorder %s31, 0
      %p236 = por %p234, %p235
      %s238 = sadd.s32 %s237, 1
      %p241 = scmp.eq.s32.totalorder %s25, 1
      %p242 = scmp.ne.s32.totalorder %s237, %s239
      %p243 = scmp.eq.s32.totalorder %s25, 0
      %p244 = por %p242, %p243
      %p245 = scmp.ne.s32.totalorder %s237, %s239
      %p246 = scmp.eq.s32.totalorder %s30, 1
      %p247 = por %p245, %p246
      %p248 = scmp.ne.s32.totalorder %s239, %s240
      %p249 = scmp.eq.s32.totalorder %s30, 0
      %p250 = por %p248, %p249
      %p251 = scmp.ne.s32.totalorder %s239, %s240
      %p252 = scmp.eq.s32.totalorder %s31, 1
      %p253 = por %p251, %p252
      %p255 = scmp.ne.s32.totalorder %s240, %s254
      %p256 = scmp.eq.s32.totalorder %s31, 0
      %p257 = por %p255, %p256
      %s259 = sadd.s32 %s258, 1
      %p262 = scmp.eq.s32.totalorder %s25, 1
      %p263 = scmp.ne.s32.totalorder %s258, %s260
      %p264 = scmp.eq.s32.totalorder %s25, 0
      %p265 = por %p263, %p264
      %p266 = scmp.ne.s32.totalorder %s258, %s260
      %p267 = scmp.eq.s32.totalorder %s30, 1
      %p268 = por %p266, %p267
      %p269 = scmp.ne.s32.totalorder %s260, %s261
      %p270 = scmp.eq.s32.totalorder %s30, 0
      %p271 = por %p269, %p270
      %p272 = scmp.ne.s32.totalorder %s260, %s261
      %p273 = scmp.eq.s32.totalorder %s31, 1
      %p274 = por %p272, %p273
      %p276 = scmp.ne.s32.totalorder %s261, %s275
      %p277 = scmp.eq.s32.totalorder %s31, 0
      %p278 = por %p276, %p277
      %s279 = ssub.s32 %s25, %s32
      %p280 = scmp.eq.s32.totalorder %s279, 0
      %s282 = sadd.s32 %s281, 1
      %s283 = scalar_select %p280, %s281, %s282
      %p286 = pneg %p280
      %p287 = scmp.eq.s32.totalorder %s25, 1
      %p288 = por %p286, %p287
      %p289 = scmp.ne.s32.totalorder %s281, %s284
      %p290 = scmp.eq.s32.totalorder %s25, 0
      %p291 = por %p289, %p290
      %p292 = scmp.ne.s32.totalorder %s281, %s284
      %p293 = scmp.eq.s32.totalorder %s30, 1
      %p294 = por %p292, %p293
      %p295 = scmp.ne.s32.totalorder %s284, %s285
      %p296 = scmp.eq.s32.totalorder %s30, 0
      %p297 = por %p295, %p296
      %p298 = scmp.ne.s32.totalorder %s284, %s285
      %p299 = scmp.eq.s32.totalorder %s31, 1
      %p300 = por %p298, %p299
      %p302 = scmp.ne.s32.totalorder %s285, %s301
      %p303 = scmp.eq.s32.totalorder %s31, 0
      %p304 = por %p302, %p303
      %s305 = ssub.s32 %s25, %s32
      %p306 = scmp.eq.s32.totalorder %s305, 0
      %s308 = sadd.s32 %s307, 1
      %s309 = scalar_select %p306, %s307, %s308
      %p312 = pneg %p306
      %p313 = scmp.eq.s32.totalorder %s25, 1
      %p314 = por %p312, %p313
      %p315 = scmp.ne.s32.totalorder %s307, %s310
      %p316 = scmp.eq.s32.totalorder %s25, 0
      %p317 = por %p315, %p316
      %p318 = scmp.ne.s32.totalorder %s307, %s310
      %p319 = scmp.eq.s32.totalorder %s30, 1
      %p320 = por %p318, %p319
      %p321 = scmp.ne.s32.totalorder %s310, %s311
      %p322 = scmp.eq.s32.totalorder %s30, 0
      %p323 = por %p321, %p322
      %p324 = scmp.ne.s32.totalorder %s310, %s311
      %p325 = scmp.eq.s32.totalorder %s31, 1
      %p326 = por %p324, %p325
      %p328 = scmp.ne.s32.totalorder %s311, %s327
      %p329 = scmp.eq.s32.totalorder %s31, 0
      %p330 = por %p328, %p329
      %p331 = scmp.le.s32.totalorder 1, %s25
      %p332 = scmp.lt.s32.totalorder %s25, 3
      %p333 = pnand %p331, %p332
      %p334 = pneg %p333
      // Predicated region
      $region9: #{tpu_custom_call.1} parent=5 // pred_check
        _
      $region10: #{tpu_custom_call.1} parent=5 // pred_check_branch
        %336 = sbr.rel (%p333) target = $region12
      $region11: #{tpu_custom_call.1} parent=5 // pred_region
        %s337 = ssub.s32 %s25, 1
        // Predicated region
        $region13: #{tpu_custom_call.1} parent=11 // pred_check
          %p338 = pneg %p124
        $region14: #{tpu_custom_call.1} parent=11 // pred_check_branch
          %340 = sbr.rel (%p338) target = $region16
        $region15: #{tpu_custom_call.1} parent=11 // pred_region
          _
        $region16: #{tpu_custom_call.1} parent=11 // pred_fallthru
          _
        // Predicated region
        $region17: #{tpu_custom_call.1} parent=11 // pred_check
          %p341 = pneg %p145
        $region18: #{tpu_custom_call.1} parent=11 // pred_check_branch
          %343 = sbr.rel (%p341) target = $region20
        $region19: #{tpu_custom_call.1} parent=11 // pred_region
          _
        $region20: #{tpu_custom_call.1} parent=11 // pred_fallthru
          _
        // Predicated region
        $region21: #{tpu_custom_call.1} parent=11 // pred_check
          %p344 = pneg %p166
        $region22: #{tpu_custom_call.1} parent=11 // pred_check_branch
          %346 = sbr.rel (%p344) target = $region24
        $region23: #{tpu_custom_call.1} parent=11 // pred_region
          _
        $region24: #{tpu_custom_call.1} parent=11 // pred_fallthru
          _
        // Predicated region
        $region25: #{tpu_custom_call.1} parent=11 // pred_check
          %p347 = pneg %p187
        $region26: #{tpu_custom_call.1} parent=11 // pred_check_branch
          %349 = sbr.rel (%p347) target = $region28
        $region27: #{tpu_custom_call.1} parent=11 // pred_region
          _
        $region28: #{tpu_custom_call.1} parent=11 // pred_fallthru
          _
        // Predicated region
        $region29: #{tpu_custom_call.1} parent=11 // pred_check
          %p350 = pneg %p208
        $region30: #{tpu_custom_call.1} parent=11 // pred_check_branch
          %352 = sbr.rel (%p350) target = $region32
        $region31: #{tpu_custom_call.1} parent=11 // pred_region
          _
        $region32: #{tpu_custom_call.1} parent=11 // pred_fallthru
          _
        // Predicated region
        $region33: #{tpu_custom_call.1} parent=11 // pred_check
          %p353 = pneg %p229
        $region34: #{tpu_custom_call.1} parent=11 // pred_check_branch
          %355 = sbr.rel (%p353) target = $region36
        $region35: #{tpu_custom_call.1} parent=11 // pred_region
          _
        $region36: #{tpu_custom_call.1} parent=11 // pred_fallthru
          _
        // Predicated region
        $region37: #{tpu_custom_call.1} parent=11 // pred_check
          %p356 = pneg %p250
        $region38: #{tpu_custom_call.1} parent=11 // pred_check_branch
          %358 = sbr.rel (%p356) target = $region40
        $region39: #{tpu_custom_call.1} parent=11 // pred_region
          _
        $region40: #{tpu_custom_call.1} parent=11 // pred_fallthru
          _
        // Predicated region
        $region41: #{tpu_custom_call.1} parent=11 // pred_check
          %p359 = pneg %p271
        $region42: #{tpu_custom_call.1} parent=11 // pred_check_branch
          %361 = sbr.rel (%p359) target = $region44
        $region43: #{tpu_custom_call.1} parent=11 // pred_region
          _
        $region44: #{tpu_custom_call.1} parent=11 // pred_fallthru
          _
      $region12: #{tpu_custom_call.1} parent=5 // pred_fallthru
        _
      %p362 = scmp.lt.s32.totalorder %s25, 2
      // Predicated region
      $region45: #{tpu_custom_call.1} parent=5 // pred_check
        %p363 = pneg %p362
      $region46: #{tpu_custom_call.1} parent=5 // pred_check_branch
        %365 = sbr.rel (%p363) target = $region48
      $region47: #{tpu_custom_call.1} parent=5 // pred_region
        // Predicated region
        $region49: #{tpu_custom_call.1} parent=47 // pred_check
          %p366 = pneg %p45
        $region50: #{tpu_custom_call.1} parent=47 // pred_check_branch
          %368 = sbr.rel (%p366) target = $region52
        $region51: #{tpu_custom_call.1} parent=47 // pred_region
          %p369 = scmp.lt.s32.totalorder %s25, 1
          %s370 = scalar_select %p369, %s25, 1
          %s371 = smul.addr %s370, 2
          %s372 = smul.addr %s371, 8
          %s373 = scalar_lea.vmem %s0, %s372
        $region52: #{tpu_custom_call.1} parent=47 // pred_fallthru
          _
        // Predicated region
        $region53: #{tpu_custom_call.1} parent=47 // pred_check
          %p374 = pneg %p71
        $region54: #{tpu_custom_call.1} parent=47 // pred_check_branch
          %376 = sbr.rel (%p374) target = $region56
        $region55: #{tpu_custom_call.1} parent=47 // pred_region
          %p377 = scmp.lt.s32.totalorder %s25, 1
          %s378 = scalar_select %p377, %s25, 1
          %s379 = smul.addr %s378, 16
          %s380 = smul.addr %s379, 8
          %s381 = scalar_lea.vmem %s1, %s380
        $region56: #{tpu_custom_call.1} parent=47 // pred_fallthru
          _
        // Predicated region
        $region57: #{tpu_custom_call.1} parent=47 // pred_check
          %p382 = pneg %p97
        $region58: #{tpu_custom_call.1} parent=47 // pred_check_branch
          %384 = sbr.rel (%p382) target = $region60
        $region59: #{tpu_custom_call.1} parent=47 // pred_region
          %p385 = scmp.lt.s32.totalorder %s25, 1
          %s386 = scalar_select %p385, %s25, 1
          %s387 = smul.addr %s386, 16
          %s388 = smul.addr %s387, 8
          %s389 = scalar_lea.vmem %s2, %s388
        $region60: #{tpu_custom_call.1} parent=47 // pred_fallthru
          _
      $region48: #{tpu_custom_call.1} parent=5 // pred_fallthru
        _
      %p390 = scmp.le.s32.totalorder 1, %s25
      %p391 = scmp.lt.s32.totalorder %s25, 3
      %p392 = pnand %p390, %p391
      %p393 = pneg %p392
      // Predicated region
      $region61: #{tpu_custom_call.1} parent=5 // pred_check
        _
      $region62: #{tpu_custom_call.1} parent=5 // pred_check_branch
        %395 = sbr.rel (%p392) target = $region64
      $region63: #{tpu_custom_call.1} parent=5 // pred_region
        %s396 = ssub.s32 %s25, 1
        %p397 = scmp.lt.s32.totalorder %s30, 1
        %s398 = scalar_select %p397, %s30, 1
        %s399 = smul.addr %s398, 2
        %s400 = smul.addr %s399, 8
        %s401 = scalar_lea.vmem %s0, %s400
        %p402 = pneg %p51
        %p403 = pneg %p48
        %p404 = scmp.lt.s32.totalorder %s30, 1
        %s405 = scalar_select %p404, %s30, 1
        %s406 = smul.addr %s405, 16
        %s407 = smul.addr %s406, 8
        %s408 = scalar_lea.vmem %s1, %s407
        %p409 = pneg %p77
        %p410 = pneg %p74
        %p411 = scmp.lt.s32.totalorder %s30, 1
        %s412 = scalar_select %p411, %s30, 1
        %s413 = smul.addr %s412, 16
        %s414 = smul.addr %s413, 8
        %s415 = scalar_lea.vmem %s2, %s414
        %p416 = pneg %p103
        %p417 = pneg %p100
        %p418 = pneg %p124
        %p419 = pneg %p121
        %p420 = pneg %p145
        %p421 = pneg %p142
        %p422 = pneg %p166
        %p423 = pneg %p163
        %p424 = pneg %p187
        %p425 = pneg %p184
        %p426 = pneg %p208
        %p427 = pneg %p205
        %p428 = pneg %p229
        %p429 = pneg %p226
        %p430 = pneg %p250
        %p431 = pneg %p247
        %p432 = pneg %p271
        %p433 = pneg %p268
        %p434 = pneg %p297
        %p435 = pneg %p294
        %s436 = sand.u32 %s284, 1
        %s437 = scalar_lea.sflag [#allocation3], %s436
        %s438 = sand.u32 %s284, 1
        %s439 = smul.addr %s438, 16
        %s440 = scalar_lea.vmem [#allocation2], %s439
        %p441 = pneg %p323
        %p442 = pneg %p320
        %s443 = sand.u32 %s310, 1
        %s444 = scalar_lea.sflag [#allocation5], %s443
        %s445 = sand.u32 %s310, 1
        %s446 = smul.addr %s445, 16
        %s447 = scalar_lea.vmem [#allocation4], %s446
        %p448 = scmp.lt.s32.totalorder %s30, 1
        %s449 = scalar_select %p448, %s30, 1
        %s450 = smul.addr %s449, 2
        %s451 = smul.addr %s450, 8
        %s452 = scalar_lea.vmem %s0, %s451
        %p453 = scmp.lt.s32.totalorder %s30, 1
        %s454 = scalar_select %p453, %s30, 1
        %s455 = smul.addr %s454, 16
        %s456 = smul.addr %s455, 8
        %s457 = scalar_lea.vmem %s1, %s456
        %p458 = scmp.lt.s32.totalorder %s30, 1
        %s459 = scalar_select %p458, %s30, 1
        %s460 = smul.addr %s459, 16
        %s461 = smul.addr %s460, 8
        %s462 = scalar_lea.vmem %s2, %s461
        %v463 = vld [vmem:[%s452] sm:$0xff]
        %v464 = vld [vmem:[%s452 + $0x8] sm:$0xff]
        %v465 = vld [vmem:[%s3] sm:$0xff]
        %v466 = vld [vmem:[%s3 + $0x8] sm:$0xff]
        %v467 = vld [vmem:[%s3 + $0x10] sm:$0xff]
        %v468 = vld [vmem:[%s3 + $0x18] sm:$0xff]
        %v469 = vld [vmem:[%s4] sm:$0x1]
        %v471 = vlaneseq
        %v472 = vshrl.u32 %v471, 7
        %v473 = vsub.s32 0, %v472
        %v474 = vrot.slane %v469, %v473
        %vm476 = vcmask 261120
        %v478 = vsel %vm476, %v463, 0
        %v481 = vsel %vm476, %v464, 0
        %483 = vmatprep.subr.mxu0 0.0
        %484 = vmatpush1.msra.mxu0 %v465
        %485 = vmatprep.subr.mxu0 0.0
        %486 = vmatpush1.msra.mxu0 %v466
        %487 = vmatprep.subr.mxu0 0.0
        %488 = vmatpush1.msra.mxu0 %v467
        %489 = vmatprep.subr.mxu0 0.0
        %490 = vmatpush1.msra.mxu0 %v468
        %491 = vmatprep.subr.mxu0 0.0
        %492 = vmatpush1.msra.mxu0 0.0
        %493 = vmatprep.subr.mxu0 0.0
        %494 = vmatpush1.msra.mxu0 0.0
        %495 = vmatprep.subr.mxu0 0.0
        %496 = vmatpush1.msra.mxu0 0.0
        %497 = vmatprep.subr.mxu0 0.0
        %498 = vmatpush1.msra.mxu0 0.0
        %499 = vmatprep.subr.mxu0 0.0
        %500 = vmatpush1.msra.mxu0 0.0
        %501 = vmatprep.subr.mxu0 0.0
        %502 = vmatpush1.msra.mxu0 0.0
        %503 = vmatprep.subr.mxu0 0.0
        %504 = vmatpush1.msra.mxu0 0.0
        %505 = vmatprep.subr.mxu0 0.0
        %506 = vmatpush1.msra.mxu0 0.0
        %507 = vmatprep.subr.mxu0 0.0
        %508 = vmatpush1.msra.mxu0 0.0
        %509 = vmatprep.subr.mxu0 0.0
        %510 = vmatpush1.msra.mxu0 0.0
        %511 = vmatprep.subr.mxu0 0.0
        %512 = vmatpush1.msra.mxu0 0.0
        %513 = vmatprep.subr.mxu0 0.0
        %514 = vmatpush1.msra.mxu0 0.0
        %515 = vmatprep.subr.mxu0 0.0
        %516 = vmatpush1.msra.mxu0 0.0
        %517 = vmatprep.subr.mxu0 0.0
        %518 = vmatpush1.msra.mxu0 0.0
        %519 = vmatprep.subr.mxu0 0.0
        %520 = vmatpush1.msra.mxu0 0.0
        %521 = vmatprep.subr.mxu0 0.0
        %522 = vmatpush1.msra.mxu0 0.0
        %523 = vmatprep.subr.mxu0 0.0
        %524 = vmatpush1.msra.mxu0 0.0
        %525 = vmatprep.subr.mxu0 0.0
        %526 = vmatpush1.msra.mxu0 0.0
        %527 = vmatprep.subr.mxu0 0.0
        %528 = vmatpush1.msra.mxu0 0.0
        %529 = vmatprep.subr.mxu0 0.0
        %530 = vmatpush1.msra.mxu0 0.0
        %531 = vmatprep.subr.mxu0 0.0
        %532 = vmatpush1.msra.mxu0 0.0
        %533 = vmatprep.subr.mxu0 0.0
        %534 = vmatpush1.msra.mxu0 0.0
        %535 = vmatprep.subr.mxu0 0.0
        %536 = vmatpush1.msra.mxu0 0.0
        %537 = vmatprep.subr.mxu0 0.0
        %538 = vmatpush1.msra.mxu0 0.0
        %539 = vmatprep.subr.mxu0 0.0
        %540 = vmatpush1.msra.mxu0 0.0
        %541 = vmatprep.subr.mxu0 0.0
        %542 = vmatpush1.msra.mxu0 0.0
        %543 = vmatprep.subr.mxu0 0.0
        %544 = vmatpush1.msra.mxu0 0.0
        %545 = vmatprep.subr.mxu0 0.0
        %546 = vmatpush1.msra.mxu0 0.0
        %547 = vmatprep.mubr.f32.mxu0 0.0
        %548 = vmatmul.mubr.f32.gmra.mrb[0].mxu0 %v478
        %v549 = vpop.f32.mrb[0].mxu0
        %v550 = vadd.f32 %v474, %v549
        %v551 = vpop.f32.mrb[0].mxu0
        %552 = vmatprep.mubr.f32.mxu0 0.0
        %553 = vmatmul.mubr.f32.gmra.mrb[0].mxu0 %v481
        %v554 = vpop.f32.mrb[0].mxu0
        %v555 = vadd.f32 %v474, %v554
        %v556 = vpop.f32.mrb[0].mxu0
        %557 = vdwg.mxu0
        %v558 = vld [vmem:[%s457] sm:$0xff]
        %v559 = vld [vmem:[%s457 + $0x8] sm:$0xff]
        %v560 = vld [vmem:[%s457 + $0x10] sm:$0xff]
        %v561 = vld [vmem:[%s457 + $0x18] sm:$0xff]
        %v562 = vld [vmem:[%s457 + $0x20] sm:$0xff]
        %v563 = vld [vmem:[%s457 + $0x28] sm:$0xff]
        %v564 = vld [vmem:[%s457 + $0x30] sm:$0xff]
        %v565 = vld [vmem:[%s457 + $0x38] sm:$0xff]
        %v566 = vld [vmem:[%s457 + $0x40] sm:$0xff]
        %v567 = vld [vmem:[%s457 + $0x48] sm:$0xff]
        %v568 = vld [vmem:[%s457 + $0x50] sm:$0xff]
        %v569 = vld [vmem:[%s457 + $0x58] sm:$0xff]
        %v570 = vld [vmem:[%s457 + $0x60] sm:$0xff]
        %v571 = vld [vmem:[%s457 + $0x68] sm:$0xff]
        %v572 = vld [vmem:[%s457 + $0x70] sm:$0xff]
        %v573 = vld [vmem:[%s457 + $0x78] sm:$0xff]
        %v574 = vld [vmem:[%s5] sm:$0xff]
        %v575 = vld [vmem:[%s5 + $0x8] sm:$0xff]
        %v576 = vld [vmem:[%s5 + $0x10] sm:$0xff]
        %v577 = vld [vmem:[%s5 + $0x18] sm:$0xff]
        %v578 = vld [vmem:[%s6] sm:$0x1]
        %v580 = vlaneseq
        %v581 = vshrl.u32 %v580, 7
        %v582 = vsub.s32 0, %v581
        %v583 = vrot.slane %v578, %v582
        %v586 = vsel %vm476, %v558, 0
        %v589 = vsel %vm476, %v559, 0
        %v592 = vsel %vm476, %v560, 0
        %v595 = vsel %vm476, %v561, 0
        %v598 = vsel %vm476, %v562, 0
        %v601 = vsel %vm476, %v563, 0
        %v604 = vsel %vm476, %v564, 0
        %v607 = vsel %vm476, %v565, 0
        %v610 = vsel %vm476, %v566, 0
        %v613 = vsel %vm476, %v567, 0
        %v616 = vsel %vm476, %v568, 0
        %v619 = vsel %vm476, %v569, 0
        %v622 = vsel %vm476, %v570, 0
        %v625 = vsel %vm476, %v571, 0
        %v628 = vsel %vm476, %v572, 0
        %v631 = vsel %vm476, %v573, 0
        %633 = vmatprep.subr.mxu0 0.0
        %634 = vmatpush1.msra.mxu0 %v574
        %635 = vmatprep.subr.mxu0 0.0
        %636 = vmatpush1.msra.mxu0 %v575
        %637 = vmatprep.subr.mxu0 0.0
        %638 = vmatpush1.msra.mxu0 %v576
        %639 = vmatprep.subr.mxu0 0.0
        %640 = vmatpush1.msra.mxu0 %v577
        %641 = vmatprep.subr.mxu0 0.0
        %642 = vmatpush1.msra.mxu0 0.0
        %643 = vmatprep.subr.mxu0 0.0
        %644 = vmatpush1.msra.mxu0 0.0
        %645 = vmatprep.subr.mxu0 0.0
        %646 = vmatpush1.msra.mxu0 0.0
        %647 = vmatprep.subr.mxu0 0.0
        %648 = vmatpush1.msra.mxu0 0.0
        %649 = vmatprep.subr.mxu0 0.0
        %650 = vmatpush1.msra.mxu0 0.0
        %651 = vmatprep.subr.mxu0 0.0
        %652 = vmatpush1.msra.mxu0 0.0
        %653 = vmatprep.subr.mxu0 0.0
        %654 = vmatpush1.msra.mxu0 0.0
        %655 = vmatprep.subr.mxu0 0.0
        %656 = vmatpush1.msra.mxu0 0.0
        %657 = vmatprep.subr.mxu0 0.0
        %658 = vmatpush1.msra.mxu0 0.0
        %659 = vmatprep.subr.mxu0 0.0
        %660 = vmatpush1.msra.mxu0 0.0
        %661 = vmatprep.subr.mxu0 0.0
        %662 = vmatpush1.msra.mxu0 0.0
        %663 = vmatprep.subr.mxu0 0.0
        %664 = vmatpush1.msra.mxu0 0.0
        %665 = vmatprep.subr.mxu0 0.0
        %666 = vmatpush1.msra.mxu0 0.0
        %667 = vmatprep.subr.mxu0 0.0
        %668 = vmatpush1.msra.mxu0 0.0
        %669 = vmatprep.subr.mxu0 0.0
        %670 = vmatpush1.msra.mxu0 0.0
        %671 = vmatprep.subr.mxu0 0.0
        %672 = vmatpush1.msra.mxu0 0.0
        %673 = vmatprep.subr.mxu0 0.0
        %674 = vmatpush1.msra.mxu0 0.0
        %675 = vmatprep.subr.mxu0 0.0
        %676 = vmatpush1.msra.mxu0 0.0
        %677 = vmatprep.subr.mxu0 0.0
        %678 = vmatpush1.msra.mxu0 0.0
        %679 = vmatprep.subr.mxu0 0.0
        %680 = vmatpush1.msra.mxu0 0.0
        %681 = vmatprep.subr.mxu0 0.0
        %682 = vmatpush1.msra.mxu0 0.0
        %683 = vmatprep.subr.mxu0 0.0
        %684 = vmatpush1.msra.mxu0 0.0
        %685 = vmatprep.subr.mxu0 0.0
        %686 = vmatpush1.msra.mxu0 0.0
        %687 = vmatprep.subr.mxu0 0.0
        %688 = vmatpush1.msra.mxu0 0.0
        %689 = vmatprep.subr.mxu0 0.0
        %690 = vmatpush1.msra.mxu0 0.0
        %691 = vmatprep.subr.mxu0 0.0
        %692 = vmatpush1.msra.mxu0 0.0
        %693 = vmatprep.subr.mxu0 0.0
        %694 = vmatpush1.msra.mxu0 0.0
        %695 = vmatprep.subr.mxu0 0.0
        %696 = vmatpush1.msra.mxu0 0.0
        %697 = vmatprep.mubr.f32.mxu0 0.0
        %698 = vmatmul.mubr.f32.gmra.mrb[0].mxu0 %v586
        %v699 = vpop.f32.mrb[0].mxu0
        %v700 = vadd.f32 %v583, %v699
        %v701 = vpop.f32.mrb[0].mxu0
        %702 = vmatprep.mubr.f32.mxu0 0.0
        %703 = vmatmul.mubr.f32.gmra.mrb[0].mxu0 %v589
        %v704 = vpop.f32.mrb[0].mxu0
        %v705 = vadd.f32 %v583, %v704
        %v706 = vpop.f32.mrb[0].mxu0
        %707 = vmatprep.mubr.f32.mxu0 0.0
        %708 = vmatmul.mubr.f32.gmra.mrb[0].mxu0 %v592
        %v709 = vpop.f32.mrb[0].mxu0
        %v710 = vadd.f32 %v583, %v709
        %v711 = vpop.f32.mrb[0].mxu0
        %712 = vmatprep.mubr.f32.mxu0 0.0
        %713 = vmatmul.mubr.f32.gmra.mrb[0].mxu0 %v595
        %v714 = vpop.f32.mrb[0].mxu0
        %v715 = vadd.f32 %v583, %v714
        %v716 = vpop.f32.mrb[0].mxu0
        %717 = vmatprep.mubr.f32.mxu0 0.0
        %718 = vmatmul.mubr.f32.gmra.mrb[0].mxu0 %v598
        %v719 = vpop.f32.mrb[0].mxu0
        %v720 = vadd.f32 %v583, %v719
        %v721 = vpop.f32.mrb[0].mxu0
        %722 = vmatprep.mubr.f32.mxu0 0.0
        %723 = vmatmul.mubr.f32.gmra.mrb[0].mxu0 %v601
        %v724 = vpop.f32.mrb[0].mxu0
        %v725 = vadd.f32 %v583, %v724
        %v726 = vpop.f32.mrb[0].mxu0
        %727 = vmatprep.mubr.f32.mxu0 0.0
        %728 = vmatmul.mubr.f32.gmra.mrb[0].mxu0 %v604
        %v729 = vpop.f32.mrb[0].mxu0
        %v730 = vadd.f32 %v583, %v729
        %v731 = vpop.f32.mrb[0].mxu0
        %732 = vmatprep.mubr.f32.mxu0 0.0
        %733 = vmatmul.mubr.f32.gmra.mrb[0].mxu0 %v607
        %v734 = vpop.f32.mrb[0].mxu0
        %v735 = vadd.f32 %v583, %v734
        %v736 = vpop.f32.mrb[0].mxu0
        %737 = vmatprep.mubr.f32.mxu0 0.0
        %738 = vmatmul.mubr.f32.gmra.mrb[0].mxu0 %v610
        %v739 = vpop.f32.mrb[0].mxu0
        %v740 = vadd.f32 %v583, %v739
        %v741 = vpop.f32.mrb[0].mxu0
        %742 = vmatprep.mubr.f32.mxu0 0.0
        %743 = vmatmul.mubr.f32.gmra.mrb[0].mxu0 %v613
        %v744 = vpop.f32.mrb[0].mxu0
        %v745 = vadd.f32 %v583, %v744
        %v746 = vpop.f32.mrb[0].mxu0
        %747 = vmatprep.mubr.f32.mxu0 0.0
        %748 = vmatmul.mubr.f32.gmra.mrb[0].mxu0 %v616
        %v749 = vpop.f32.mrb[0].mxu0
        %v750 = vadd.f32 %v583, %v749
        %v751 = vpop.f32.mrb[0].mxu0
        %752 = vmatprep.mubr.f32.mxu0 0.0
        %753 = vmatmul.mubr.f32.gmra.mrb[0].mxu0 %v619
        %v754 = vpop.f32.mrb[0].mxu0
        %v755 = vadd.f32 %v583, %v754
        %v756 = vpop.f32.mrb[0].mxu0
        %757 = vmatprep.mubr.f32.mxu0 0.0
        %758 = vmatmul.mubr.f32.gmra.mrb[0].mxu0 %v622
        %v759 = vpop.f32.mrb[0].mxu0
        %v760 = vadd.f32 %v583, %v759
        %v761 = vpop.f32.mrb[0].mxu0
        %762 = vmatprep.mubr.f32.mxu0 0.0
        %763 = vmatmul.mubr.f32.gmra.mrb[0].mxu0 %v625
        %v764 = vpop.f32.mrb[0].mxu0
        %v765 = vadd.f32 %v583, %v764
        %v766 = vpop.f32.mrb[0].mxu0
        %767 = vmatprep.mubr.f32.mxu0 0.0
        %768 = vmatmul.mubr.f32.gmra.mrb[0].mxu0 %v628
        %v769 = vpop.f32.mrb[0].mxu0
        %v770 = vadd.f32 %v583, %v769
        %v771 = vpop.f32.mrb[0].mxu0
        %772 = vmatprep.mubr.f32.mxu0 0.0
        %773 = vmatmul.mubr.f32.gmra.mrb[0].mxu0 %v631
        %v774 = vpop.f32.mrb[0].mxu0
        %v775 = vadd.f32 %v583, %v774
        %v776 = vpop.f32.mrb[0].mxu0
        %777 = vdwg.mxu0
        %v778 = vld [vmem:[%s462] sm:$0xff]
        %v779 = vld [vmem:[%s462 + $0x8] sm:$0xff]
        %v780 = vld [vmem:[%s462 + $0x10] sm:$0xff]
        %v781 = vld [vmem:[%s462 + $0x18] sm:$0xff]
        %v782 = vld [vmem:[%s462 + $0x20] sm:$0xff]
        %v783 = vld [vmem:[%s462 + $0x28] sm:$0xff]
        %v784 = vld [vmem:[%s462 + $0x30] sm:$0xff]
        %v785 = vld [vmem:[%s462 + $0x38] sm:$0xff]
        %v786 = vld [vmem:[%s462 + $0x40] sm:$0xff]
        %v787 = vld [vmem:[%s462 + $0x48] sm:$0xff]
        %v788 = vld [vmem:[%s462 + $0x50] sm:$0xff]
        %v789 = vld [vmem:[%s462 + $0x58] sm:$0xff]
        %v790 = vld [vmem:[%s462 + $0x60] sm:$0xff]
        %v791 = vld [vmem:[%s462 + $0x68] sm:$0xff]
        %v792 = vld [vmem:[%s462 + $0x70] sm:$0xff]
        %v793 = vld [vmem:[%s462 + $0x78] sm:$0xff]
        %v794 = vld [vmem:[%s7] sm:$0xff]
        %v795 = vld [vmem:[%s7 + $0x8] sm:$0xff]
        %v796 = vld [vmem:[%s7 + $0x10] sm:$0xff]
        %v797 = vld [vmem:[%s7 + $0x18] sm:$0xff]
        %v798 = vld [vmem:[%s8] sm:$0x1]
        %v800 = vlaneseq
        %v801 = vshrl.u32 %v800, 7
        %v802 = vsub.s32 0, %v801
        %v803 = vrot.slane %v798, %v802
        %v806 = vsel %vm476, %v778, 0
        %v809 = vsel %vm476, %v779, 0
        %v812 = vsel %vm476, %v780, 0
        %v815 = vsel %vm476, %v781, 0
        %v818 = vsel %vm476, %v782, 0
        %v821 = vsel %vm476, %v783, 0
        %v824 = vsel %vm476, %v784, 0
        %v827 = vsel %vm476, %v785, 0
        %v830 = vsel %vm476, %v786, 0
        %v833 = vsel %vm476, %v787, 0
        %v836 = vsel %vm476, %v788, 0
        %v839 = vsel %vm476, %v789, 0
        %v842 = vsel %vm476, %v790, 0
        %v845 = vsel %vm476, %v791, 0
        %v848 = vsel %vm476, %v792, 0
        %v851 = vsel %vm476, %v793, 0
        %853 = vmatprep.subr.mxu0 0.0
        %854 = vmatpush1.msra.mxu0 %v794
        %855 = vmatprep.subr.mxu0 0.0
        %856 = vmatpush1.msra.mxu0 %v795
        %857 = vmatprep.subr.mxu0 0.0
        %858 = vmatpush1.msra.mxu0 %v796
        %859 = vmatprep.subr.mxu0 0.0
        %860 = vmatpush1.msra.mxu0 %v797
        %861 = vmatprep.subr.mxu0 0.0
        %862 = vmatpush1.msra.mxu0 0.0
        %863 = vmatprep.subr.mxu0 0.0
        %864 = vmatpush1.msra.mxu0 0.0
        %865 = vmatprep.subr.mxu0 0.0
        %866 = vmatpush1.msra.mxu0 0.0
        %867 = vmatprep.subr.mxu0 0.0
        %868 = vmatpush1.msra.mxu0 0.0
        %869 = vmatprep.subr.mxu0 0.0
        %870 = vmatpush1.msra.mxu0 0.0
        %871 = vmatprep.subr.mxu0 0.0
        %872 = vmatpush1.msra.mxu0 0.0
        %873 = vmatprep.subr.mxu0 0.0
        %874 = vmatpush1.msra.mxu0 0.0
        %875 = vmatprep.subr.mxu0 0.0
        %876 = vmatpush1.msra.mxu0 0.0
        %877 = vmatprep.subr.mxu0 0.0
        %878 = vmatpush1.msra.mxu0 0.0
        %879 = vmatprep.subr.mxu0 0.0
        %880 = vmatpush1.msra.mxu0 0.0
        %881 = vmatprep.subr.mxu0 0.0
        %882 = vmatpush1.msra.mxu0 0.0
        %883 = vmatprep.subr.mxu0 0.0
        %884 = vmatpush1.msra.mxu0 0.0
        %885 = vmatprep.subr.mxu0 0.0
        %886 = vmatpush1.msra.mxu0 0.0
        %887 = vmatprep.subr.mxu0 0.0
        %888 = vmatpush1.msra.mxu0 0.0
        %889 = vmatprep.subr.mxu0 0.0
        %890 = vmatpush1.msra.mxu0 0.0
        %891 = vmatprep.subr.mxu0 0.0
        %892 = vmatpush1.msra.mxu0 0.0
        %893 = vmatprep.subr.mxu0 0.0
        %894 = vmatpush1.msra.mxu0 0.0
        %895 = vmatprep.subr.mxu0 0.0
        %896 = vmatpush1.msra.mxu0 0.0
        %897 = vmatprep.subr.mxu0 0.0
        %898 = vmatpush1.msra.mxu0 0.0
        %899 = vmatprep.subr.mxu0 0.0
        %900 = vmatpush1.msra.mxu0 0.0
        %901 = vmatprep.subr.mxu0 0.0
        %902 = vmatpush1.msra.mxu0 0.0
        %903 = vmatprep.subr.mxu0 0.0
        %904 = vmatpush1.msra.mxu0 0.0
        %905 = vmatprep.subr.mxu0 0.0
        %906 = vmatpush1.msra.mxu0 0.0
        %907 = vmatprep.subr.mxu0 0.0
        %908 = vmatpush1.msra.mxu0 0.0
        %909 = vmatprep.subr.mxu0 0.0
        %910 = vmatpush1.msra.mxu0 0.0
        %911 = vmatprep.subr.mxu0 0.0
        %912 = vmatpush1.msra.mxu0 0.0
        %913 = vmatprep.subr.mxu0 0.0
        %914 = vmatpush1.msra.mxu0 0.0
        %915 = vmatprep.subr.mxu0 0.0
        %916 = vmatpush1.msra.mxu0 0.0
        %917 = vmatprep.mubr.f32.mxu0 0.0
        %918 = vmatmul.mubr.f32.gmra.mrb[0].mxu0 %v806
        %v919 = vpop.f32.mrb[0].mxu0
        %v920 = vadd.f32 %v803, %v919
        %v921 = vpop.f32.mrb[0].mxu0
        %922 = vmatprep.mubr.f32.mxu0 0.0
        %923 = vmatmul.mubr.f32.gmra.mrb[0].mxu0 %v809
        %v924 = vpop.f32.mrb[0].mxu0
        %v925 = vadd.f32 %v803, %v924
        %v926 = vpop.f32.mrb[0].mxu0
        %927 = vmatprep.mubr.f32.mxu0 0.0
        %928 = vmatmul.mubr.f32.gmra.mrb[0].mxu0 %v812
        %v929 = vpop.f32.mrb[0].mxu0
        %v930 = vadd.f32 %v803, %v929
        %v931 = vpop.f32.mrb[0].mxu0
        %932 = vmatprep.mubr.f32.mxu0 0.0
        %933 = vmatmul.mubr.f32.gmra.mrb[0].mxu0 %v815
        %v934 = vpop.f32.mrb[0].mxu0
        %v935 = vadd.f32 %v803, %v934
        %v936 = vpop.f32.mrb[0].mxu0
        %937 = vmatprep.mubr.f32.mxu0 0.0
        %938 = vmatmul.mubr.f32.gmra.mrb[0].mxu0 %v818
        %v939 = vpop.f32.mrb[0].mxu0
        %v940 = vadd.f32 %v803, %v939
        %v941 = vpop.f32.mrb[0].mxu0
        %942 = vmatprep.mubr.f32.mxu0 0.0
        %943 = vmatmul.mubr.f32.gmra.mrb[0].mxu0 %v821
        %v944 = vpop.f32.mrb[0].mxu0
        %v945 = vadd.f32 %v803, %v944
        %v946 = vpop.f32.mrb[0].mxu0
        %947 = vmatprep.mubr.f32.mxu0 0.0
        %948 = vmatmul.mubr.f32.gmra.mrb[0].mxu0 %v824
        %v949 = vpop.f32.mrb[0].mxu0
        %v950 = vadd.f32 %v803, %v949
        %v951 = vpop.f32.mrb[0].mxu0
        %952 = vmatprep.mubr.f32.mxu0 0.0
        %953 = vmatmul.mubr.f32.gmra.mrb[0].mxu0 %v827
        %v954 = vpop.f32.mrb[0].mxu0
        %v955 = vadd.f32 %v803, %v954
        %v956 = vpop.f32.mrb[0].mxu0
        %957 = vmatprep.mubr.f32.mxu0 0.0
        %958 = vmatmul.mubr.f32.gmra.mrb[0].mxu0 %v830
        %v959 = vpop.f32.mrb[0].mxu0
        %v960 = vadd.f32 %v803, %v959
        %v961 = vpop.f32.mrb[0].mxu0
        %962 = vmatprep.mubr.f32.mxu0 0.0
        %963 = vmatmul.mubr.f32.gmra.mrb[0].mxu0 %v833
        %v964 = vpop.f32.mrb[0].mxu0
        %v965 = vadd.f32 %v803, %v964
        %v966 = vpop.f32.mrb[0].mxu0
        %967 = vmatprep.mubr.f32.mxu0 0.0
        %968 = vmatmul.mubr.f32.gmra.mrb[0].mxu0 %v836
        %v969 = vpop.f32.mrb[0].mxu0
        %v970 = vadd.f32 %v803, %v969
        %v971 = vpop.f32.mrb[0].mxu0
        %972 = vmatprep.mubr.f32.mxu0 0.0
        %973 = vmatmul.mubr.f32.gmra.mrb[0].mxu0 %v839
        %v974 = vpop.f32.mrb[0].mxu0
        %v975 = vadd.f32 %v803, %v974
        %v976 = vpop.f32.mrb[0].mxu0
        %977 = vmatprep.mubr.f32.mxu0 0.0
        %978 = vmatmul.mubr.f32.gmra.mrb[0].mxu0 %v842
        %v979 = vpop.f32.mrb[0].mxu0
        %v980 = vadd.f32 %v803, %v979
        %v981 = vpop.f32.mrb[0].mxu0
        %982 = vmatprep.mubr.f32.mxu0 0.0
        %983 = vmatmul.mubr.f32.gmra.mrb[0].mxu0 %v845
        %v984 = vpop.f32.mrb[0].mxu0
        %v985 = vadd.f32 %v803, %v984
        %v986 = vpop.f32.mrb[0].mxu0
        %987 = vmatprep.mubr.f32.mxu0 0.0
        %988 = vmatmul.mubr.f32.gmra.mrb[0].mxu0 %v848
        %v989 = vpop.f32.mrb[0].mxu0
        %v990 = vadd.f32 %v803, %v989
        %v991 = vpop.f32.mrb[0].mxu0
        %992 = vmatprep.mubr.f32.mxu0 0.0
        %993 = vmatmul.mubr.f32.gmra.mrb[0].mxu0 %v851
        %v994 = vpop.f32.mrb[0].mxu0
        %v995 = vadd.f32 %v803, %v994
        %v996 = vpop.f32.mrb[0].mxu0
        %997 = vdwg.mxu0
        %v999 = vsel %vm476, %v550, 0
        %v1002 = vsel %vm476, %v555, 0
        %v1005 = vsel %vm476, %v700, 0
        %v1008 = vsel %vm476, %v705, 0
        %v1011 = vsel %vm476, %v710, 0
        %v1014 = vsel %vm476, %v715, 0
        %v1017 = vsel %vm476, %v720, 0
        %v1020 = vsel %vm476, %v725, 0
        %v1023 = vsel %vm476, %v730, 0
        %v1026 = vsel %vm476, %v735, 0
        %v1029 = vsel %vm476, %v740, 0
        %v1032 = vsel %vm476, %v745, 0
        %v1035 = vsel %vm476, %v750, 0
        %v1038 = vsel %vm476, %v755, 0
        %v1041 = vsel %vm476, %v760, 0
        %v1044 = vsel %vm476, %v765, 0
        %v1047 = vsel %vm476, %v770, 0
        %v1050 = vsel %vm476, %v775, 0
        %1052 = vmatprep.subr.mxu0 0.0
        %1053 = vmatpush1.xpose.msra.mxu0 %v1005
        %1054 = vmatprep.subr.mxu0 0.0
        %1055 = vmatpush1.xpose.msra.mxu0 %v1008
        %1056 = vmatprep.subr.mxu0 0.0
        %1057 = vmatpush1.xpose.msra.mxu0 %v1011
        %1058 = vmatprep.subr.mxu0 0.0
        %1059 = vmatpush1.xpose.msra.mxu0 %v1014
        %1060 = vmatprep.subr.mxu0 0.0
        %1061 = vmatpush1.xpose.msra.mxu0 %v1017
        %1062 = vmatprep.subr.mxu0 0.0
        %1063 = vmatpush1.xpose.msra.mxu0 %v1020
        %1064 = vmatprep.subr.mxu0 0.0
        %1065 = vmatpush1.xpose.msra.mxu0 %v1023
        %1066 = vmatprep.subr.mxu0 0.0
        %1067 = vmatpush1.xpose.msra.mxu0 %v1026
        %1068 = vmatprep.subr.mxu0 0.0
        %1069 = vmatpush1.xpose.msra.mxu0 %v1029
        %1070 = vmatprep.subr.mxu0 0.0
        %1071 = vmatpush1.xpose.msra.mxu0 %v1032
        %1072 = vmatprep.subr.mxu0 0.0
        %1073 = vmatpush1.xpose.msra.mxu0 %v1035
        %1074 = vmatprep.subr.mxu0 0.0
        %1075 = vmatpush1.xpose.msra.mxu0 %v1038
        %1076 = vmatprep.subr.mxu0 0.0
        %1077 = vmatpush1.xpose.msra.mxu0 %v1041
        %1078 = vmatprep.subr.mxu0 0.0
        %1079 = vmatpush1.xpose.msra.mxu0 %v1044
        %1080 = vmatprep.subr.mxu0 0.0
        %1081 = vmatpush1.xpose.msra.mxu0 %v1047
        %1082 = vmatprep.subr.mxu0 0.0
        %1083 = vmatpush1.xpose.msra.mxu0 %v1050
        %1084 = vmatprep.subr.mxu0 0.0
        %1085 = vmatpush1.xpose.msra.mxu0 0.0
        %1086 = vmatprep.subr.mxu0 0.0
        %1087 = vmatpush1.xpose.msra.mxu0 0.0
        %1088 = vmatprep.subr.mxu0 0.0
        %1089 = vmatpush1.xpose.msra.mxu0 0.0
        %1090 = vmatprep.subr.mxu0 0.0
        %1091 = vmatpush1.xpose.msra.mxu0 0.0
        %1092 = vmatprep.subr.mxu0 0.0
        %1093 = vmatpush1.xpose.msra.mxu0 0.0
        %1094 = vmatprep.subr.mxu0 0.0
        %1095 = vmatpush1.xpose.msra.mxu0 0.0
        %1096 = vmatprep.subr.mxu0 0.0
        %1097 = vmatpush1.xpose.msra.mxu0 0.0
        %1098 = vmatprep.subr.mxu0 0.0
        %1099 = vmatpush1.xpose.msra.mxu0 0.0
        %1100 = vmatprep.subr.mxu0 0.0
        %1101 = vmatpush1.xpose.msra.mxu0 0.0
        %1102 = vmatprep.subr.mxu0 0.0
        %1103 = vmatpush1.xpose.msra.mxu0 0.0
        %1104 = vmatprep.subr.mxu0 0.0
        %1105 = vmatpush1.xpose.msra.mxu0 0.0
        %1106 = vmatprep.subr.mxu0 0.0
        %1107 = vmatpush1.xpose.msra.mxu0 0.0
        %1108 = vmatprep.subr.mxu0 0.0
        %1109 = vmatpush1.xpose.msra.mxu0 0.0
        %1110 = vmatprep.subr.mxu0 0.0
        %1111 = vmatpush1.xpose.msra.mxu0 0.0
        %1112 = vmatprep.subr.mxu0 0.0
        %1113 = vmatpush1.xpose.msra.mxu0 0.0
        %1114 = vmatprep.subr.mxu0 0.0
        %1115 = vmatpush1.xpose.msra.mxu0 0.0
        %1116 = vmatprep.mubr.f32.mxu0 0.0
        %1117 = vmatmul.mubr.f32.gmra.mrb[0].mxu0 %v999
        %v1118 = vpop.f32.mrb[0].mxu0
        %v1119 = vadd.f32 0.0, %v1118
        %v1120 = vpop.f32.mrb[0].mxu0
        %1121 = vmatprep.mubr.f32.mxu0 0.0
        %1122 = vmatmul.mubr.f32.gmra.mrb[0].mxu0 %v1002
        %v1123 = vpop.f32.mrb[0].mxu0
        %v1124 = vadd.f32 0.0, %v1123
        %v1125 = vpop.f32.mrb[0].mxu0
        %1126 = vdwg.mxu0
        %v1127 = vlaneseq
        %v1128 = vand.u32 %v1127, 127
        %vm1129 = vcmp.lt.s32.totalorder %v1128, 16
        %v1130 = vsel %vm1129, %v1119, -1e+30
        %v1131 = vsel %vm1129, %v1124, -1e+30
        %1132 = vmax.xlane.f32.xlu0 %v1130
        %v1133 = vpop.xlane.xlu0 %1132
        %1134 = vmax.xlane.f32.xlu0 %v1131
        %v1135 = vpop.xlane.xlu0 %1134
        %v1136 = vsub.f32 %v1130, %v1133
        %v1137 = vsub.f32 %v1131, %v1135
        %v1138 = vmul.f32 %v1136, 1.442695
        %v1139 = vpow.pop %v1138
        %v1140 = vmul.f32 %v1137, 1.442695
        %v1141 = vpow.pop %v1140
        %1142 = vadd.xlane.f32.xlu0 %v1139
        %v1143 = vpop.xlane.xlu0 %1142
        %1144 = vadd.xlane.f32.xlu0 %v1141
        %v1145 = vpop.xlane.xlu0 %1144
        %v1146 = vrcp.pop %v1143
        %v1147 = vmul.f32 1.0, %v1146
        %v1148 = vrcp.pop %v1145
        %v1149 = vmul.f32 1.0, %v1148
        %1150 = vmatprep.subr.mxu0 0.0
        %1151 = vmatpush1.msra.mxu0 %v920
        %1152 = vmatprep.subr.mxu0 0.0
        %1153 = vmatpush1.msra.mxu0 %v925
        %1154 = vmatprep.subr.mxu0 0.0
        %1155 = vmatpush1.msra.mxu0 %v930
        %1156 = vmatprep.subr.mxu0 0.0
        %1157 = vmatpush1.msra.mxu0 %v935
        %1158 = vmatprep.subr.mxu0 0.0
        %1159 = vmatpush1.msra.mxu0 %v940
        %1160 = vmatprep.subr.mxu0 0.0
        %1161 = vmatpush1.msra.mxu0 %v945
        %1162 = vmatprep.subr.mxu0 0.0
        %1163 = vmatpush1.msra.mxu0 %v950
        %1164 = vmatprep.subr.mxu0 0.0
        %1165 = vmatpush1.msra.mxu0 %v955
        %1166 = vmatprep.subr.mxu0 0.0
        %1167 = vmatpush1.msra.mxu0 %v960
        %1168 = vmatprep.subr.mxu0 0.0
        %1169 = vmatpush1.msra.mxu0 %v965
        %1170 = vmatprep.subr.mxu0 0.0
        %1171 = vmatpush1.msra.mxu0 %v970
        %1172 = vmatprep.subr.mxu0 0.0
        %1173 = vmatpush1.msra.mxu0 %v975
        %1174 = vmatprep.subr.mxu0 0.0
        %1175 = vmatpush1.msra.mxu0 %v980
        %1176 = vmatprep.subr.mxu0 0.0
        %1177 = vmatpush1.msra.mxu0 %v985
        %1178 = vmatprep.subr.mxu0 0.0
        %1179 = vmatpush1.msra.mxu0 %v990
        %1180 = vmatprep.subr.mxu0 0.0
        %1181 = vmatpush1.msra.mxu0 %v995
        %1182 = vmatprep.subr.mxu0 0.0
        %1183 = vmatpush1.msra.mxu0 0.0
        %1184 = vmatprep.subr.mxu0 0.0
        %1185 = vmatpush1.msra.mxu0 0.0
        %1186 = vmatprep.subr.mxu0 0.0
        %1187 = vmatpush1.msra.mxu0 0.0
        %1188 = vmatprep.subr.mxu0 0.0
        %1189 = vmatpush1.msra.mxu0 0.0
        %1190 = vmatprep.subr.mxu0 0.0
        %1191 = vmatpush1.msra.mxu0 0.0
        %1192 = vmatprep.subr.mxu0 0.0
        %1193 = vmatpush1.msra.mxu0 0.0
        %1194 = vmatprep.subr.mxu0 0.0
        %1195 = vmatpush1.msra.mxu0 0.0
        %1196 = vmatprep.subr.mxu0 0.0
        %1197 = vmatpush1.msra.mxu0 0.0
        %1198 = vmatprep.subr.mxu0 0.0
        %1199 = vmatpush1.msra.mxu0 0.0
        %1200 = vmatprep.subr.mxu0 0.0
        %1201 = vmatpush1.msra.mxu0 0.0
        %1202 = vmatprep.subr.mxu0 0.0
        %1203 = vmatpush1.msra.mxu0 0.0
        %1204 = vmatprep.subr.mxu0 0.0
        %1205 = vmatpush1.msra.mxu0 0.0
        %1206 = vmatprep.subr.mxu0 0.0
        %1207 = vmatpush1.msra.mxu0 0.0
        %1208 = vmatprep.subr.mxu0 0.0
        %1209 = vmatpush1.msra.mxu0 0.0
        %1210 = vmatprep.subr.mxu0 0.0
        %1211 = vmatpush1.msra.mxu0 0.0
        %1212 = vmatprep.subr.mxu0 0.0
        %1213 = vmatpush1.msra.mxu0 0.0
        %1214 = vmatprep.mubr.f32.mxu0 0.0
        %1215 = vmatmul.mubr.f32.gmra.mrb[0].mxu0 %v1139
        %v1216 = vpop.f32.mrb[0].mxu0
        %v1217 = vadd.f32 0.0, %v1216
        %v1218 = vpop.f32.mrb[0].mxu0
        %1219 = vmatprep.mubr.f32.mxu0 0.0
        %1220 = vmatmul.mubr.f32.gmra.mrb[0].mxu0 %v1141
        %v1221 = vpop.f32.mrb[0].mxu0
        %v1222 = vadd.f32 0.0, %v1221
        %v1223 = vpop.f32.mrb[0].mxu0
        %1224 = vdwg.mxu0
        %v1225 = vmul.f32 %v1217, %v1147
        %v1226 = vmul.f32 %v1222, %v1149
        %v1227 = vld [vmem:[%s9] sm:$0xff]
        %v1228 = vld [vmem:[%s9 + $0x8] sm:$0xff]
        %v1229 = vld [vmem:[%s9 + $0x10] sm:$0xff]
        %v1230 = vld [vmem:[%s9 + $0x18] sm:$0xff]
        %v1231 = vld [vmem:[%s10] sm:$0x1]
        %v1233 = vlaneseq
        %v1234 = vshrl.u32 %v1233, 7
        %v1235 = vsub.s32 0, %v1234
        %v1236 = vrot.slane %v1231, %v1235
        %v1239 = vsel %vm476, %v1225, 0
        %v1242 = vsel %vm476, %v1226, 0
        %1244 = vmatprep.subr.mxu0 0.0
        %1245 = vmatpush1.msra.mxu0 %v1227
        %1246 = vmatprep.subr.mxu0 0.0
        %1247 = vmatpush1.msra.mxu0 %v1228
        %1248 = vmatprep.subr.mxu0 0.0
        %1249 = vmatpush1.msra.mxu0 %v1229
        %1250 = vmatprep.subr.mxu0 0.0
        %1251 = vmatpush1.msra.mxu0 %v1230
        %1252 = vmatprep.subr.mxu0 0.0
        %1253 = vmatpush1.msra.mxu0 0.0
        %1254 = vmatprep.subr.mxu0 0.0
        %1255 = vmatpush1.msra.mxu0 0.0
        %1256 = vmatprep.subr.mxu0 0.0
        %1257 = vmatpush1.msra.mxu0 0.0
        %1258 = vmatprep.subr.mxu0 0.0
        %1259 = vmatpush1.msra.mxu0 0.0
        %1260 = vmatprep.subr.mxu0 0.0
        %1261 = vmatpush1.msra.mxu0 0.0
        %1262 = vmatprep.subr.mxu0 0.0
        %1263 = vmatpush1.msra.mxu0 0.0
        %1264 = vmatprep.subr.mxu0 0.0
        %1265 = vmatpush1.msra.mxu0 0.0
        %1266 = vmatprep.subr.mxu0 0.0
        %1267 = vmatpush1.msra.mxu0 0.0
        %1268 = vmatprep.subr.mxu0 0.0
        %1269 = vmatpush1.msra.mxu0 0.0
        %1270 = vmatprep.subr.mxu0 0.0
        %1271 = vmatpush1.msra.mxu0 0.0
        %1272 = vmatprep.subr.mxu0 0.0
        %1273 = vmatpush1.msra.mxu0 0.0
        %1274 = vmatprep.subr.mxu0 0.0
        %1275 = vmatpush1.msra.mxu0 0.0
        %1276 = vmatprep.subr.mxu0 0.0
        %1277 = vmatpush1.msra.mxu0 0.0
        %1278 = vmatprep.subr.mxu0 0.0
        %1279 = vmatpush1.msra.mxu0 0.0
        %1280 = vmatprep.subr.mxu0 0.0
        %1281 = vmatpush1.msra.mxu0 0.0
        %1282 = vmatprep.subr.mxu0 0.0
        %1283 = vmatpush1.msra.mxu0 0.0
        %1284 = vmatprep.subr.mxu0 0.0
        %1285 = vmatpush1.msra.mxu0 0.0
        %1286 = vmatprep.subr.mxu0 0.0
        %1287 = vmatpush1.msra.mxu0 0.0
        %1288 = vmatprep.subr.mxu0 0.0
        %1289 = vmatpush1.msra.mxu0 0.0
        %1290 = vmatprep.subr.mxu0 0.0
        %1291 = vmatpush1.msra.mxu0 0.0
        %1292 = vmatprep.subr.mxu0 0.0
        %1293 = vmatpush1.msra.mxu0 0.0
        %1294 = vmatprep.subr.mxu0 0.0
        %1295 = vmatpush1.msra.mxu0 0.0
        %1296 = vmatprep.subr.mxu0 0.0
        %1297 = vmatpush1.msra.mxu0 0.0
        %1298 = vmatprep.subr.mxu0 0.0
        %1299 = vmatpush1.msra.mxu0 0.0
        %1300 = vmatprep.subr.mxu0 0.0
        %1301 = vmatpush1.msra.mxu0 0.0
        %1302 = vmatprep.subr.mxu0 0.0
        %1303 = vmatpush1.msra.mxu0 0.0
        %1304 = vmatprep.subr.mxu0 0.0
        %1305 = vmatpush1.msra.mxu0 0.0
        %1306 = vmatprep.subr.mxu0 0.0
        %1307 = vmatpush1.msra.mxu0 0.0
        %1308 = vmatprep.mubr.f32.mxu0 0.0
        %1309 = vmatmul.mubr.f32.gmra.mrb[0].mxu0 %v1239
        %v1310 = vpop.f32.mrb[0].mxu0
        %v1311 = vadd.f32 %v1236, %v1310
        %v1312 = vpop.f32.mrb[0].mxu0
        %1313 = vmatprep.mubr.f32.mxu0 0.0
        %1314 = vmatmul.mubr.f32.gmra.mrb[0].mxu0 %v1242
        %v1315 = vpop.f32.mrb[0].mxu0
        %v1316 = vadd.f32 %v1236, %v1315
        %v1317 = vpop.f32.mrb[0].mxu0
        %1318 = vdwg.mxu0
        %1319 = vst.msk [vmem:[%s440] sm:$0xff] %vm476, %v1311
        %1320 = vst.msk [vmem:[%s440 + $0x8] sm:$0xff] %vm476, %v1316
        %v1321 = vmul.f32 %v1139, %v1147
        %v1322 = vmul.f32 %v1141, %v1149
        %1323 = vst [vmem:[%s447] sm:$0xff] %v1321
        %1324 = vst [vmem:[%s447 + $0x8] sm:$0xff] %v1322
        %s1325 = sand.u32 %s284, 1
        %s1326 = scalar_lea.sflag [#allocation3], %s1325
        %s1327 = sand.u32 %s284, 1
        %s1328 = smul.addr %s1327, 16
        %s1329 = scalar_lea.vmem [#allocation2], %s1328
        %s1330 = sand.u32 %s310, 1
        %s1331 = scalar_lea.sflag [#allocation5], %s1330
        %s1332 = sand.u32 %s310, 1
        %s1333 = smul.addr %s1332, 16
        %s1334 = scalar_lea.vmem [#allocation4], %s1333
        // Predicated region
        $region65: #{tpu_custom_call.1} parent=63 // pred_check
          %p1335 = pneg %p294
        $region66: #{tpu_custom_call.1} parent=63 // pred_check_branch
          %1337 = sbr.rel (%p1335) target = $region68
        $region67: #{tpu_custom_call.1} parent=63 // pred_region
          %s1339 = ssub.s32 256, 256
          %1340 = vsyncadd %s1326, %s1339
          %s1341 = smul.addr %s30, 2
          %s1342 = smul.addr %s1341, 128
          %s1343 = scalar_lea.hbm %s11, %s1342
          %s1344 = sshll.u32 %s1329, 4
          %s1345 = int_to_ptr.vmem [resolvable:$true] %s1344
          %1350 = dma.vmem_to_hbm [thread:$0]  %s1345, 256, %s1343, %s1326, 128, 128, 8
        $region68: #{tpu_custom_call.1} parent=63 // pred_fallthru
          _
        // Predicated region
        $region69: #{tpu_custom_call.1} parent=63 // pred_check
          %p1351 = pneg %p320
        $region70: #{tpu_custom_call.1} parent=63 // pred_check_branch
          %1353 = sbr.rel (%p1351) target = $region72
        $region71: #{tpu_custom_call.1} parent=63 // pred_region
          %s1355 = ssub.s32 256, 256
          %1356 = vsyncadd %s1331, %s1355
          %s1357 = smul.addr %s30, 2
          %s1358 = smul.addr %s1357, 128
          %s1359 = scalar_lea.hbm %s12, %s1358
          %s1360 = sshll.u32 %s1334, 4
          %s1361 = int_to_ptr.vmem [resolvable:$true] %s1360
          %1366 = dma.vmem_to_hbm [thread:$0]  %s1361, 256, %s1359, %s1331, 128, 128, 8
        $region72: #{tpu_custom_call.1} parent=63 // pred_fallthru
          _
      $region64: #{tpu_custom_call.1} parent=5 // pred_fallthru
        _
      %p1367 = scmp.le.s32.totalorder 2, %s25
      // Predicated region
      $region73: #{tpu_custom_call.1} parent=5 // pred_check
        %p1368 = pneg %p1367
      $region74: #{tpu_custom_call.1} parent=5 // pred_check_branch
        %1370 = sbr.rel (%p1368) target = $region76
      $region75: #{tpu_custom_call.1} parent=5 // pred_region
        %s1371 = ssub.s32 %s25, 2
        // Predicated region
        $region77: #{tpu_custom_call.1} parent=75 // pred_check
          %p1372 = pneg %p300
        $region78: #{tpu_custom_call.1} parent=75 // pred_check_branch
          %1374 = sbr.rel (%p1372) target = $region80
        $region79: #{tpu_custom_call.1} parent=75 // pred_region
          %s1375 = sand.u32 %s285, 1
          %s1376 = scalar_lea.sflag [#allocation3], %s1375
          %s1377 = sand.u32 %s285, 1
          %s1378 = smul.addr %s1377, 16
          %s1379 = scalar_lea.vmem [#allocation2], %s1378
          %1380 = dma.done %s1376, 256
        $region80: #{tpu_custom_call.1} parent=75 // pred_fallthru
          _
        // Predicated region
        $region81: #{tpu_custom_call.1} parent=75 // pred_check
          %p1381 = pneg %p326
        $region82: #{tpu_custom_call.1} parent=75 // pred_check_branch
          %1383 = sbr.rel (%p1381) target = $region84
        $region83: #{tpu_custom_call.1} parent=75 // pred_region
          %s1384 = sand.u32 %s311, 1
          %s1385 = scalar_lea.sflag [#allocation5], %s1384
          %s1386 = sand.u32 %s311, 1
          %s1387 = smul.addr %s1386, 16
          %s1388 = scalar_lea.vmem [#allocation4], %s1387
          %1389 = dma.done %s1385, 256
        $region84: #{tpu_custom_call.1} parent=75 // pred_fallthru
          _
      $region76: #{tpu_custom_call.1} parent=5 // pred_fallthru
        _
    $region6: #{tpu_custom_call.1} parent=1 // loop_footer
      %s29 = sadd.s32 1, %s25
    $region7: #{tpu_custom_call.1} parent=1 // loop_footer_branch
      %24 = sbr.rel target = $region3
    $region8: #{tpu_custom_call.1} parent=1 // loop_exit
      _
    %1390 = vsyncpa [#allocation3], 1
    %s1391 = scalar_lea.sflag [#allocation3], 1
    %1392 = vsyncpa %s1391, 1
    %1393 = vsyncpa [#allocation5], 1
    %s1394 = scalar_lea.sflag [#allocation5], 1
    %1395 = vsyncpa %s1394, 1

</llo_original>
